<compile_context>
chip_gen: v7x
topology: tpu7x:2x2x1
jax: 0.10.0
libtpu: 0.0.40
codegen_flags: <defaults>
</compile_context>

<pallas_src>
import jax
import jax.numpy as jnp
from jax.experimental import pallas as pl
from jax.experimental.pallas import tpu as pltpu


# ---------------------------------------------------------------------------
# Fused decoder kernel (one batch element per grid step).
# ---------------------------------------------------------------------------
def _decoder_kernel(xt_ref, xl_ref, it_ref,
                    wtop_ref, w2_ref, w3abot_ref,
                    wstack_ref, bstack_ref,
                    seg_ref, x3_ref):
    f32 = jnp.float32
    bf16 = jnp.bfloat16

    xt = xt_ref[0].astype(bf16)          # (512, HW_lo)
    xl = xl_ref[0].astype(bf16)          # (256, HW)

    # (conv1 ∘ conv3a_top) with BN scales folded — still at low resolution.
    top_low = jnp.dot(wtop_ref[...], xt, preferred_element_type=f32)      # (256, HW_lo)
    # Bilinear align_corners=True upsample as a spatial right-matmul.
    top_hi = jnp.dot(top_low.astype(bf16), it_ref[...],
                     preferred_element_type=f32)                          # (256, HW)

    # conv2 (BN scale folded; shift propagated into the final bias).
    xl2 = jnp.dot(w2_ref[...], xl, preferred_element_type=f32)            # (48, HW)
    # conv3a bottom half (replaces the 304-channel concat).
    bot = jnp.dot(w3abot_ref[...], xl2.astype(bf16),
                  preferred_element_type=f32)                             # (256, HW)

    x3a = (top_hi + bot).astype(bf16)                                     # (256, HW)

    # Stacked [conv3b ; conv4∘conv3b] matmul + single propagated bias add.
    y = jnp.dot(wstack_ref[...], x3a, preferred_element_type=f32) + bstack_ref[...]
    c3 = x3_ref.shape[1]
    x3_ref[0] = y[:c3]                    # (256, HW)
    seg_ref[0] = y[c3:]                   # (nc_pad, HW), padded rows are zero


# ---------------------------------------------------------------------------
# Bilinear (align_corners=True) 1-D interpolation weights.
# ---------------------------------------------------------------------------
def _interp_matrix(out_size, in_size):
    if in_size == 1:
        return jnp.ones((out_size, 1), jnp.float32)
    denom = max(out_size - 1, 1)
    pos = jnp.arange(out_size, dtype=jnp.float32) * (in_size - 1) / denom
    i0 = jnp.clip(jnp.floor(pos).astype(jnp.int32), 0, in_size - 2)
    frac = pos - i0.astype(jnp.float32)
    rows = jnp.arange(out_size)
    mat = jnp.zeros((out_size, in_size), jnp.float32)
    mat = mat.at[rows, i0].add(1.0 - frac)
    mat = mat.at[rows, i0 + 1].add(frac)
    return mat


# ---------------------------------------------------------------------------
# Parameters (deterministic, synthetic) + forward pass.
# ---------------------------------------------------------------------------
def _fold_bn(gamma, beta, mean, var, eps=1e-5):
    scale = gamma / jnp.sqrt(var + eps)
    shift = beta - mean * scale
    return scale, shift


def init_params(key, num_classes):
    ks = iter(jax.random.split(key, 32))

    def conv_w(cin, cout):
        return jax.random.normal(next(ks), (cin, cout), jnp.float32) / jnp.sqrt(
            jnp.float32(cin))

    def bn(c):
        gamma = 1.0 + 0.1 * jax.random.normal(next(ks), (c,), jnp.float32)
        beta = 0.1 * jax.random.normal(next(ks), (c,), jnp.float32)
        mean = 0.1 * jax.random.normal(next(ks), (c,), jnp.float32)
        var = 0.5 + jax.random.uniform(next(ks), (c,), jnp.float32)
        return _fold_bn(gamma, beta, mean, var)

    p = {}
    p['w1'] = conv_w(512, 256); p['s1'], p['b1'] = bn(256)          # conv1
    p['w2'] = conv_w(256, 48);  p['s2'], p['b2'] = bn(48)           # conv2
    p['w3a'] = conv_w(304, 256); p['s3a'], p['b3a'] = bn(256)       # conv3[0:2]
    p['w3b'] = conv_w(256, 256); p['s3b'], p['b3b'] = bn(256)       # conv3[2:4]
    p['w4'] = conv_w(256, num_classes)                              # conv4 (bias)
    p['b4'] = 0.1 * jax.random.normal(next(ks), (num_classes,), jnp.float32)
    return p


def decoder_module_forward(params, xt_nchw, xl_nchw):
    # TODO(synk): BatchNorm2d is inference-mode only (running stats folded into
    # a per-channel affine); training-mode batch statistics are not computed.
    n, ct, ht, wt = xt_nchw.shape
    _, cl, h, w = xl_nchw.shape
    hw_lo, hw_hi = ht * wt, h * w
    nc = params['w4'].shape[1]
    c_up = params['w1'].shape[1]       # 256
    c3 = params['w3b'].shape[1]        # 256
    nc_pad = max(8, -(-nc // 8) * 8)   # seg channels padded to sublane multiple

    # NCHW -> (N, C, H*W) is a pure reshape (no transpose needed).
    xt = xt_nchw.reshape(n, ct, hw_lo).astype(jnp.float32)
    xl = xl_nchw.reshape(n, cl, hw_hi).astype(jnp.float32)

    # Dense interpolation matrix, transposed for the (C, HW) layout.
    # TODO(synk): switch to the separable two-matmul form before scaling
    # spatial resolution (dense matrix is O((HW)^2) and would exhaust v7x VMEM).
    wy = _interp_matrix(h, ht)
    wx = _interp_matrix(w, wt)
    it = (wy[:, None, :, None] * wx[None, :, None, :]).reshape(hw_hi, hw_lo).T  # (HW_lo, HW_hi)

    # ---- Host-side linear-chain composition (f32 algebra) -------------------
    w1s = params['w1'] * params['s1'][None, :]          # (512, 256)  BN1 scale folded
    w2s = params['w2'] * params['s2'][None, :]          # (256, 48)   BN2 scale folded
    w3as = params['w3a'] * params['s3a'][None, :]       # (304, 256)  BN3a scale folded
    w3a_top = w3as[:c_up]                               # (256, 256)
    w3a_bot = w3as[c_up:]                               # (48, 256)
    w3bs = params['w3b'] * params['s3b'][None, :]       # (256, 256)  BN3b scale folded

    # conv1 ∘ conv3a_top pre-composition.
    wtop_t = w3a_top.T @ w1s.T                          # (256, 512)
    w2_t = w2s.T                                        # (48, 256)
    w3abot_t = w3a_bot.T                                # (256, 48)

    # Propagate all BN shifts to a single bias after conv3b / conv4.
    sh3a_eff = params['b3a'] + w3a_top.T @ params['b1'] + w3a_bot.T @ params['b2']
    sh3b_eff = params['b3b'] + w3bs.T @ sh3a_eff        # (256,)
    w4eff_t = params['w4'].T @ w3bs.T                   # (nc, 256)   conv4 ∘ conv3b
    b4_eff = params['b4'] + params['w4'].T @ sh3b_eff   # (nc,)

    # Stack conv3b and (padded) conv4 into one weight / one bias.
    w4pad = jnp.zeros((nc_pad, c3), jnp.float32).at[:nc].set(w4eff_t)
    b4pad = jnp.zeros((nc_pad,), jnp.float32).at[:nc].set(b4_eff)
    wstack_t = jnp.concatenate([w3bs.T, w4pad], axis=0)               # (256+nc_pad, 256)
    bstack = jnp.concatenate([sh3b_eff, b4pad]).reshape(-1, 1)        # (256+nc_pad, 1) f32

    # Ship weights in bf16 (accumulation / bias / outputs remain f32).
    bf16 = jnp.bfloat16
    it_b = it.astype(bf16)
    wtop_b = wtop_t.astype(bf16)
    w2_b = w2_t.astype(bf16)
    w3abot_b = w3abot_t.astype(bf16)
    wstack_b = wstack_t.astype(bf16)

    seg_pad, x3 = pl.pallas_call(
        _decoder_kernel,
        out_shape=(jax.ShapeDtypeStruct((n, nc_pad, hw_hi), jnp.float32),
                   jax.ShapeDtypeStruct((n, c3, hw_hi), jnp.float32)),
        grid_spec=pltpu.PrefetchScalarGridSpec(
            num_scalar_prefetch=0,
            grid=(n,),
            in_specs=[
                pl.BlockSpec((1, ct, hw_lo), lambda b: (b, 0, 0)),
                pl.BlockSpec((1, cl, hw_hi), lambda b: (b, 0, 0)),
                pl.BlockSpec(it_b.shape, lambda b: (0, 0)),
                pl.BlockSpec(wtop_b.shape, lambda b: (0, 0)),
                pl.BlockSpec(w2_b.shape, lambda b: (0, 0)),
                pl.BlockSpec(w3abot_b.shape, lambda b: (0, 0)),
                pl.BlockSpec(wstack_b.shape, lambda b: (0, 0)),
                pl.BlockSpec(bstack.shape, lambda b: (0, 0)),
            ],
            out_specs=[
                pl.BlockSpec((1, nc_pad, hw_hi), lambda b: (b, 0, 0)),
                pl.BlockSpec((1, c3, hw_hi), lambda b: (b, 0, 0)),
            ],
        ),
        compiler_params=pltpu.CompilerParams(
            dimension_semantics=("parallel",)),
    )(xt, xl, it_b, wtop_b, w2_b, w3abot_b, wstack_b, bstack)

    # Drop the seg channel padding; (N, C, H*W) -> NCHW is a pure reshape.
    seg = seg_pad[:, :nc].reshape(n, nc, h, w)
    return seg, x3.reshape(n, c3, h, w)


# Pure-JAX reference following the original PyTorch op order (NCHW, f32).
def reference_forward(params, xt_nchw, xl_nchw):
    xt = xt_nchw.astype(jnp.float32)
    xl = xl_nchw.astype(jnp.float32)
    _, _, h, w = xl.shape

    def conv_bn(x, wgt, s, b):
        y = jnp.einsum('nchw,cd->ndhw', x, wgt)
        return y * s[None, :, None, None] + b[None, :, None, None]

    xt1 = conv_bn(xt, params['w1'], params['s1'], params['b1'])
    wy = _interp_matrix(h, xt1.shape[2])
    wx = _interp_matrix(w, xt1.shape[3])
    xt_up = jnp.einsum('Hh,nchw,Ww->ncHW', wy, xt1, wx)
    xl2 = conv_bn(xl, params['w2'], params['s2'], params['b2'])
    xcat = jnp.concatenate([xt_up, xl2], axis=1)
    x3 = conv_bn(xcat, params['w3a'], params['s3a'], params['b3a'])
    x3 = conv_bn(x3, params['w3b'], params['s3b'], params['b3b'])
    seg = (jnp.einsum('nchw,cd->ndhw', x3, params['w4'])
           + params['b4'][None, :, None, None])
    return seg, x3


if __name__ == "__main__":
    num_classes = 20
    key = jax.random.PRNGKey(0)
    k_xt, k_xl, k_p = jax.random.split(key, 3)

    # xt: low-res deep features (N,512,8,8); xl: high-res shallow features (N,256,16,16)
    xt = jax.random.normal(k_xt, (2, 512, 8, 8), jnp.float32)
    xl = jax.random.normal(k_xl, (2, 256, 16, 16), jnp.float32)
    params = init_params(k_p, num_classes)

    fwd = jax.jit(decoder_module_forward)
    seg, x = fwd(params, xt, xl)
    seg = jax.block_until_ready(seg)
    x = jax.block_until_ready(x)

    seg_ref, x_ref = reference_forward(params, xt, xl)
    assert seg.shape == (2, num_classes, 16, 16)
    assert x.shape == (2, 256, 16, 16)
    # Tolerance accounts for bf16 weight/activation rounding (f32 accumulation);
    # measured worst-case error is well under 1e-2 at these shapes.
    assert jnp.allclose(seg, seg_ref, rtol=2e-2, atol=2e-2)
    assert jnp.allclose(x, x_ref, rtol=2e-2, atol=2e-2)
    print("KERNEL_OK")
</pallas_src>

<mosaic_0001>
module attributes {stable_mosaic.version = 11 : i64} {
  func.func private @main(%arg0: i32) attributes {dimension_semantics = [#tpu.dimension_semantics<core_parallel>], iteration_bounds = array<i64: 2>, tpu.core_type = #tpu.core_type<sc_scalar_subcore>, window_params = []} {
    return
  }
}

module attributes {stable_mosaic.version = 11 : i64} {
  func.func private @main(%arg0: i32) attributes {dimension_semantics = [#tpu.dimension_semantics<core_parallel>], iteration_bounds = array<i64: 2>, tpu.core_type = #tpu.core_type<sc_scalar_subcore>, window_params = []} {
    return
  }
}

module attributes {stable_mosaic.version = 11 : i64} {
  func.func @_decoder_kernel(%arg0: i32, %arg1: memref<1x512x64xf32, #tpu.memory_space<vmem>>, %arg2: memref<1x256x256xf32, #tpu.memory_space<vmem>>, %arg3: memref<64x256xbf16, #tpu.memory_space<vmem>>, %arg4: memref<256x512xbf16, #tpu.memory_space<vmem>>, %arg5: memref<48x256xbf16, #tpu.memory_space<vmem>>, %arg6: memref<256x48xbf16, #tpu.memory_space<vmem>>, %arg7: memref<280x256xbf16, #tpu.memory_space<vmem>>, %arg8: memref<280x1xf32, #tpu.memory_space<vmem>>, %arg9: memref<1x24x256xf32, #tpu.memory_space<vmem>>, %arg10: memref<1x256x256xf32, #tpu.memory_space<vmem>>) attributes {dimension_semantics = [#tpu.dimension_semantics<parallel>], iteration_bounds = array<i64: 2>, scalar_prefetch = 0 : i64, scratch_operands = 0 : i64, tpu.core_type = #tpu.core_type<tc>, window_params = [{transform_indices = @transform_0, window_bounds = array<i64: 1, 512, 64>}, {transform_indices = @transform_1, window_bounds = array<i64: 1, 256, 256>}, {pipeline_mode = #tpu.pipeline_mode<synchronous>, transform_indices = @transform_2, window_bounds = array<i64: 64, 256>}, {pipeline_mode = #tpu.pipeline_mode<synchronous>, transform_indices = @transform_3, window_bounds = array<i64: 256, 512>}, {pipeline_mode = #tpu.pipeline_mode<synchronous>, transform_indices = @transform_4, window_bounds = array<i64: 48, 256>}, {pipeline_mode = #tpu.pipeline_mode<synchronous>, transform_indices = @transform_5, window_bounds = array<i64: 256, 48>}, {pipeline_mode = #tpu.pipeline_mode<synchronous>, transform_indices = @transform_6, window_bounds = array<i64: 280, 256>}, {pipeline_mode = #tpu.pipeline_mode<synchronous>, transform_indices = @transform_7, window_bounds = array<i64: 280, 1>}, {transform_indices = @transform_8, window_bounds = array<i64: 1, 24, 256>}, {transform_indices = @transform_9, window_bounds = array<i64: 1, 256, 256>}]} {
    %c0 = arith.constant 0 : index
    %c0_0 = arith.constant 0 : index
    %c0_1 = arith.constant 0 : index
    %0 = vector.load %arg1[%c0, %c0_0, %c0_1] : memref<1x512x64xf32, #tpu.memory_space<vmem>>, vector<1x512x64xf32>
    %1 = vector.shape_cast %0 : vector<1x512x64xf32> to vector<512x64xf32>
    %2 = arith.truncf %1 : vector<512x64xf32> to vector<512x64xbf16>
    %c0_2 = arith.constant 0 : index
    %c0_3 = arith.constant 0 : index
    %c0_4 = arith.constant 0 : index
    %3 = vector.load %arg2[%c0_2, %c0_3, %c0_4] : memref<1x256x256xf32, #tpu.memory_space<vmem>>, vector<1x256x256xf32>
    %4 = vector.shape_cast %3 : vector<1x256x256xf32> to vector<256x256xf32>
    %5 = arith.truncf %4 : vector<256x256xf32> to vector<256x256xbf16>
    %c0_5 = arith.constant 0 : index
    %c0_6 = arith.constant 0 : index
    %6 = vector.load %arg4[%c0_5, %c0_6] : memref<256x512xbf16, #tpu.memory_space<vmem>>, vector<256x512xbf16>
    %cst = arith.constant dense<0.000000e+00> : vector<256x64xf32>
    %7 = tpu.matmul %6, %2, %cst {dimension_numbers = #tpu.dot_dimension_numbers<[1], [0], [0], [1], [0, 0, 1, 1], [], []>} : vector<256x512xbf16>, vector<512x64xbf16>, vector<256x64xf32> -> vector<256x64xf32>
    %8 = arith.truncf %7 : vector<256x64xf32> to vector<256x64xbf16>
    %c0_7 = arith.constant 0 : index
    %c0_8 = arith.constant 0 : index
    %9 = vector.load %arg3[%c0_7, %c0_8] : memref<64x256xbf16, #tpu.memory_space<vmem>>, vector<64x256xbf16>
    %cst_9 = arith.constant dense<0.000000e+00> : vector<256x256xf32>
    %10 = tpu.matmul %8, %9, %cst_9 {dimension_numbers = #tpu.dot_dimension_numbers<[1], [0], [0], [1], [0, 0, 1, 1], [], []>} : vector<256x64xbf16>, vector<64x256xbf16>, vector<256x256xf32> -> vector<256x256xf32>
    %c0_10 = arith.constant 0 : index
    %c0_11 = arith.constant 0 : index
    %11 = vector.load %arg5[%c0_10, %c0_11] : memref<48x256xbf16, #tpu.memory_space<vmem>>, vector<48x256xbf16>
    %cst_12 = arith.constant dense<0.000000e+00> : vector<48x256xf32>
    %12 = tpu.matmul %11, %5, %cst_12 {dimension_numbers = #tpu.dot_dimension_numbers<[1], [0], [0], [1], [0, 0, 1, 1], [], []>} : vector<48x256xbf16>, vector<256x256xbf16>, vector<48x256xf32> -> vector<48x256xf32>
    %c0_13 = arith.constant 0 : index
    %c0_14 = arith.constant 0 : index
    %13 = vector.load %arg6[%c0_13, %c0_14] : memref<256x48xbf16, #tpu.memory_space<vmem>>, vector<256x48xbf16>
    %14 = arith.truncf %12 : vector<48x256xf32> to vector<48x256xbf16>
    %cst_15 = arith.constant dense<0.000000e+00> : vector<256x256xf32>
    %15 = tpu.matmul %13, %14, %cst_15 {dimension_numbers = #tpu.dot_dimension_numbers<[1], [0], [0], [1], [0, 0, 1, 1], [], []>} : vector<256x48xbf16>, vector<48x256xbf16>, vector<256x256xf32> -> vector<256x256xf32>
    %16 = arith.addf %10, %15 : vector<256x256xf32>
    %17 = arith.truncf %16 : vector<256x256xf32> to vector<256x256xbf16>
    %c0_16 = arith.constant 0 : index
    %c0_17 = arith.constant 0 : index
    %18 = vector.load %arg7[%c0_16, %c0_17] : memref<280x256xbf16, #tpu.memory_space<vmem>>, vector<280x256xbf16>
    %cst_18 = arith.constant dense<0.000000e+00> : vector<280x256xf32>
    %19 = tpu.matmul %18, %17, %cst_18 {dimension_numbers = #tpu.dot_dimension_numbers<[1], [0], [0], [1], [0, 0, 1, 1], [], []>} : vector<280x256xbf16>, vector<256x256xbf16>, vector<280x256xf32> -> vector<280x256xf32>
    %c0_19 = arith.constant 0 : index
    %c0_20 = arith.constant 0 : index
    %20 = vector.load %arg8[%c0_19, %c0_20] : memref<280x1xf32, #tpu.memory_space<vmem>>, vector<280x1xf32>
    %21 = vector.broadcast %20 : vector<280x1xf32> to vector<280x256xf32>
    %22 = arith.addf %19, %21 : vector<280x256xf32>
    %23 = vector.extract_strided_slice %22 {offsets = [0, 0], sizes = [256, 256], strides = [1, 1]} : vector<280x256xf32> to vector<256x256xf32>
    %c0_21 = arith.constant 0 : index
    %c0_22 = arith.constant 0 : index
    %c0_23 = arith.constant 0 : index
    %24 = vector.load %arg10[%c0_21, %c0_22, %c0_23] : memref<1x256x256xf32, #tpu.memory_space<vmem>>, vector<1x256x256xf32>
    %25 = vector.shape_cast %24 : vector<1x256x256xf32> to vector<256x256xf32>
    %26 = vector.shape_cast %23 : vector<256x256xf32> to vector<1x256x256xf32>
    tpu.vector_store %arg10[%c0_21, %c0_22, %c0_23], %26 {strides = array<i32>} : memref<1x256x256xf32, #tpu.memory_space<vmem>>, vector<1x256x256xf32>,
    %27 = vector.extract_strided_slice %22 {offsets = [256, 0], sizes = [24, 256], strides = [1, 1]} : vector<280x256xf32> to vector<24x256xf32>
    %c0_24 = arith.constant 0 : index
    %c0_25 = arith.constant 0 : index
    %c0_26 = arith.constant 0 : index
    %28 = vector.load %arg9[%c0_24, %c0_25, %c0_26] : memref<1x24x256xf32, #tpu.memory_space<vmem>>, vector<1x24x256xf32>
    %29 = vector.shape_cast %28 : vector<1x24x256xf32> to vector<24x256xf32>
    %30 = vector.shape_cast %27 : vector<24x256xf32> to vector<1x24x256xf32>
    tpu.vector_store %arg9[%c0_24, %c0_25, %c0_26], %30 {strides = array<i32>} : memref<1x24x256xf32, #tpu.memory_space<vmem>>, vector<1x24x256xf32>,
    return
  }
  func.func @transform_0(%arg0: i32) -> (i32, i32, i32) {
    %c0_i32 = arith.constant 0 : i32
    %c0_i32_0 = arith.constant 0 : i32
    %c0_i32_1 = arith.constant 0 : i32
    return %arg0, %c0_i32, %c0_i32_0 : i32, i32, i32
  }
  func.func @transform_1(%arg0: i32) -> (i32, i32, i32) {
    %c0_i32 = arith.constant 0 : i32
    %c0_i32_0 = arith.constant 0 : i32
    %c0_i32_1 = arith.constant 0 : i32
    return %arg0, %c0_i32, %c0_i32_0 : i32, i32, i32
  }
  func.func @transform_2(%arg0: i32) -> (i32, i32) {
    %c0_i32 = arith.constant 0 : i32
    %c0_i32_0 = arith.constant 0 : i32
    %c0_i32_1 = arith.constant 0 : i32
    return %c0_i32, %c0_i32_0 : i32, i32
  }
  func.func @transform_3(%arg0: i32) -> (i32, i32) {
    %c0_i32 = arith.constant 0 : i32
    %c0_i32_0 = arith.constant 0 : i32
    %c0_i32_1 = arith.constant 0 : i32
    return %c0_i32, %c0_i32_0 : i32, i32
  }
  func.func @transform_4(%arg0: i32) -> (i32, i32) {
    %c0_i32 = arith.constant 0 : i32
    %c0_i32_0 = arith.constant 0 : i32
    %c0_i32_1 = arith.constant 0 : i32
    return %c0_i32, %c0_i32_0 : i32, i32
  }
  func.func @transform_5(%arg0: i32) -> (i32, i32) {
    %c0_i32 = arith.constant 0 : i32
    %c0_i32_0 = arith.constant 0 : i32
    %c0_i32_1 = arith.constant 0 : i32
    return %c0_i32, %c0_i32_0 : i32, i32
  }
  func.func @transform_6(%arg0: i32) -> (i32, i32) {
    %c0_i32 = arith.constant 0 : i32
    %c0_i32_0 = arith.constant 0 : i32
    %c0_i32_1 = arith.constant 0 : i32
    return %c0_i32, %c0_i32_0 : i32, i32
  }
  func.func @transform_7(%arg0: i32) -> (i32, i32) {
    %c0_i32 = arith.constant 0 : i32
    %c0_i32_0 = arith.constant 0 : i32
    %c0_i32_1 = arith.constant 0 : i32
    return %c0_i32, %c0_i32_0 : i32, i32
  }
  func.func @transform_8(%arg0: i32) -> (i32, i32, i32) {
    %c0_i32 = arith.constant 0 : i32
    %c0_i32_0 = arith.constant 0 : i32
    %c0_i32_1 = arith.constant 0 : i32
    return %arg0, %c0_i32, %c0_i32_0 : i32, i32, i32
  }
  func.func @transform_9(%arg0: i32) -> (i32, i32, i32) {
    %c0_i32 = arith.constant 0 : i32
    %c0_i32_0 = arith.constant 0 : i32
    %c0_i32_1 = arith.constant 0 : i32
    return %arg0, %c0_i32, %c0_i32_0 : i32, i32, i32
  }
}

</mosaic_0001>

<llo_original>
// kernel: decoder_module_forward.1
$region0: #{decoder_module_forward.1}
  #allocation0 [shape = 'u32[]', space=smem, size = 0x4, offset = 0x4, fixed_abs, tag = 'smem constant byte address 0x4 - core index']
  #allocation1 [shape = 'u32[144,128]{1,0:T(1,128)}', space=vmem, size = 0x12000, scoped, tag = 'internal scratch']
  %s0 = inlined_call_operand.vmem [shape: f32[2,512,64], index: 0, kind: input, shape index: {}]
  %s1 = inlined_call_operand.vmem [shape: f32[2,256,256], index: 1, kind: input, shape index: {}]
  %s2 = inlined_call_operand.vmem [shape: bf16[64,256], index: 2, kind: input, shape index: {}]
  %s3 = inlined_call_operand.vmem [shape: bf16[256,512], index: 3, kind: input, shape index: {}]
  %s4 = inlined_call_operand.vmem [shape: bf16[48,256], index: 4, kind: input, shape index: {}]
  %s5 = inlined_call_operand.vmem [shape: bf16[256,48], index: 5, kind: input, shape index: {}]
  %s6 = inlined_call_operand.vmem [shape: bf16[280,256], index: 6, kind: input, shape index: {}]
  %s7 = inlined_call_operand.vmem [shape: f32[280,1], index: 7, kind: input, shape index: {}]
  %s8 = inlined_call_operand.vmem [shape: f32[2,24,256], index: 8, kind: output, shape index: {0}]
  %s9 = inlined_call_operand.vmem [shape: f32[2,256,256], index: 9, kind: output, shape index: {1}]
  %10 = xla_tuple %s8, %s9
  %s11 = sld [smem:[#allocation0]]
  $region73: #{decoder_module_forward.1} parent=0
    _
  %s13 = ssub.s32 1, %s11
  %s14 = scalar_select 0, %s13, %s11
  loop: start=0, step=1, limit=4
  $region2: #{decoder_module_forward.1} parent=0 // loop_pre_header
    _
  $region3: #{decoder_module_forward.1} parent=0 // loop_header
    %s16 = sphi 0, %s20
    %p17 = scmp.ge.s32.totalorder %s16, 4
    %s26 = sphi 0, %s28
    %s29 = sphi 0, %s26
    %s30 = sphi 0, %s29
    %s46 = sphi 0, %s30
    %s52 = sphi 0, %s54
    %s55 = sphi 0, %s52
    %s56 = sphi 0, %s55
    %s72 = sphi 0, %s56
    %s76 = sphi 0, %s76
    %s78 = sphi 0, %s76
    %s79 = sphi 0, %s78
    %s93 = sphi 0, %s79
    %s97 = sphi 0, %s97
    %s99 = sphi 0, %s97
    %s100 = sphi 0, %s99
    %s114 = sphi 0, %s100
    %s118 = sphi 0, %s118
    %s120 = sphi 0, %s118
    %s121 = sphi 0, %s120
    %s135 = sphi 0, %s121
    %s139 = sphi 0, %s139
    %s141 = sphi 0, %s139
    %s142 = sphi 0, %s141
    %s156 = sphi 0, %s142
    %s160 = sphi 0, %s160
    %s162 = sphi 0, %s160
    %s163 = sphi 0, %s162
    %s177 = sphi 0, %s163
    %s181 = sphi 0, %s181
    %s183 = sphi 0, %s181
    %s184 = sphi 0, %s183
    %s198 = sphi 0, %s184
    %s204 = sphi 0, %s206
    %s207 = sphi 0, %s204
    %s208 = sphi 0, %s207
    %s224 = sphi 0, %s208
    %s230 = sphi 0, %s232
    %s233 = sphi 0, %s230
    %s234 = sphi 0, %s233
    %s250 = sphi 0, %s234
  $region4: #{decoder_module_forward.1} parent=0 // loop_header_branch
    %19 = sbr.rel (%p17) target = $region8
  $region5: #{decoder_module_forward.1} parent=0 // loop_body
    %s21 = ssub.s32 %s16, 1
    %s22 = ssub.s32 %s16, 2
    %s23 = sadd.s32 %s16, 1
    %s24 = ssub.s32 %s16, %s23
    %p25 = scmp.eq.s32.totalorder %s24, 0
    %s27 = sadd.s32 %s26, 1
    %s28 = scalar_select %p25, %s26, %s27
    %p31 = pneg %p25
    %p32 = scmp.eq.s32.totalorder %s16, 1
    %p33 = por %p31, %p32
    %p34 = scmp.ne.s32.totalorder %s26, %s29
    %p35 = scmp.eq.s32.totalorder %s16, 0
    %p36 = por %p34, %p35
    %p37 = scmp.ne.s32.totalorder %s26, %s29
    %p38 = scmp.eq.s32.totalorder %s21, 1
    %p39 = por %p37, %p38
    %p40 = scmp.ne.s32.totalorder %s29, %s30
    %p41 = scmp.eq.s32.totalorder %s21, 0
    %p42 = por %p40, %p41
    %p43 = scmp.ne.s32.totalorder %s29, %s30
    %p44 = scmp.eq.s32.totalorder %s22, 1
    %p45 = por %p43, %p44
    %p47 = scmp.ne.s32.totalorder %s30, %s46
    %p48 = scmp.eq.s32.totalorder %s22, 0
    %p49 = por %p47, %p48
    %s50 = ssub.s32 %s16, %s23
    %p51 = scmp.eq.s32.totalorder %s50, 0
    %s53 = sadd.s32 %s52, 1
    %s54 = scalar_select %p51, %s52, %s53
    %p57 = pneg %p51
    %p58 = scmp.eq.s32.totalorder %s16, 1
    %p59 = por %p57, %p58
    %p60 = scmp.ne.s32.totalorder %s52, %s55
    %p61 = scmp.eq.s32.totalorder %s16, 0
    %p62 = por %p60, %p61
    %p63 = scmp.ne.s32.totalorder %s52, %s55
    %p64 = scmp.eq.s32.totalorder %s21, 1
    %p65 = por %p63, %p64
    %p66 = scmp.ne.s32.totalorder %s55, %s56
    %p67 = scmp.eq.s32.totalorder %s21, 0
    %p68 = por %p66, %p67
    %p69 = scmp.ne.s32.totalorder %s55, %s56
    %p70 = scmp.eq.s32.totalorder %s22, 1
    %p71 = por %p69, %p70
    %p73 = scmp.ne.s32.totalorder %s56, %s72
    %p74 = scmp.eq.s32.totalorder %s22, 0
    %p75 = por %p73, %p74
    %s77 = sadd.s32 %s76, 1
    %p80 = scmp.eq.s32.totalorder %s16, 1
    %p81 = scmp.ne.s32.totalorder %s76, %s78
    %p82 = scmp.eq.s32.totalorder %s16, 0
    %p83 = por %p81, %p82
    %p84 = scmp.ne.s32.totalorder %s76, %s78
    %p85 = scmp.eq.s32.totalorder %s21, 1
    %p86 = por %p84, %p85
    %p87 = scmp.ne.s32.totalorder %s78, %s79
    %p88 = scmp.eq.s32.totalorder %s21, 0
    %p89 = por %p87, %p88
    %p90 = scmp.ne.s32.totalorder %s78, %s79
    %p91 = scmp.eq.s32.totalorder %s22, 1
    %p92 = por %p90, %p91
    %p94 = scmp.ne.s32.totalorder %s79, %s93
    %p95 = scmp.eq.s32.totalorder %s22, 0
    %p96 = por %p94, %p95
    %s98 = sadd.s32 %s97, 1
    %p101 = scmp.eq.s32.totalorder %s16, 1
    %p102 = scmp.ne.s32.totalorder %s97, %s99
    %p103 = scmp.eq.s32.totalorder %s16, 0
    %p104 = por %p102, %p103
    %p105 = scmp.ne.s32.totalorder %s97, %s99
    %p106 = scmp.eq.s32.totalorder %s21, 1
    %p107 = por %p105, %p106
    %p108 = scmp.ne.s32.totalorder %s99, %s100
    %p109 = scmp.eq.s32.totalorder %s21, 0
    %p110 = por %p108, %p109
    %p111 = scmp.ne.s32.totalorder %s99, %s100
    %p112 = scmp.eq.s32.totalorder %s22, 1
    %p113 = por %p111, %p112
    %p115 = scmp.ne.s32.totalorder %s100, %s114
    %p116 = scmp.eq.s32.totalorder %s22, 0
    %p117 = por %p115, %p116
    %s119 = sadd.s32 %s118, 1
    %p122 = scmp.eq.s32.totalorder %s16, 1
    %p123 = scmp.ne.s32.totalorder %s118, %s120
    %p124 = scmp.eq.s32.totalorder %s16, 0
    %p125 = por %p123, %p124
    %p126 = scmp.ne.s32.totalorder %s118, %s120
    %p127 = scmp.eq.s32.totalorder %s21, 1
    %p128 = por %p126, %p127
    %p129 = scmp.ne.s32.totalorder %s120, %s121
    %p130 = scmp.eq.s32.totalorder %s21, 0
    %p131 = por %p129, %p130
    %p132 = scmp.ne.s32.totalorder %s120, %s121
    %p133 = scmp.eq.s32.totalorder %s22, 1
    %p134 = por %p132, %p133
    %p136 = scmp.ne.s32.totalorder %s121, %s135
    %p137 = scmp.eq.s32.totalorder %s22, 0
    %p138 = por %p136, %p137
    %s140 = sadd.s32 %s139, 1
    %p143 = scmp.eq.s32.totalorder %s16, 1
    %p144 = scmp.ne.s32.totalorder %s139, %s141
    %p145 = scmp.eq.s32.totalorder %s16, 0
    %p146 = por %p144, %p145
    %p147 = scmp.ne.s32.totalorder %s139, %s141
    %p148 = scmp.eq.s32.totalorder %s21, 1
    %p149 = por %p147, %p148
    %p150 = scmp.ne.s32.totalorder %s141, %s142
    %p151 = scmp.eq.s32.totalorder %s21, 0
    %p152 = por %p150, %p151
    %p153 = scmp.ne.s32.totalorder %s141, %s142
    %p154 = scmp.eq.s32.totalorder %s22, 1
    %p155 = por %p153, %p154
    %p157 = scmp.ne.s32.totalorder %s142, %s156
    %p158 = scmp.eq.s32.totalorder %s22, 0
    %p159 = por %p157, %p158
    %s161 = sadd.s32 %s160, 1
    %p164 = scmp.eq.s32.totalorder %s16, 1
    %p165 = scmp.ne.s32.totalorder %s160, %s162
    %p166 = scmp.eq.s32.totalorder %s16, 0
    %p167 = por %p165, %p166
    %p168 = scmp.ne.s32.totalorder %s160, %s162
    %p169 = scmp.eq.s32.totalorder %s21, 1
    %p170 = por %p168, %p169
    %p171 = scmp.ne.s32.totalorder %s162, %s163
    %p172 = scmp.eq.s32.totalorder %s21, 0
    %p173 = por %p171, %p172
    %p174 = scmp.ne.s32.totalorder %s162, %s163
    %p175 = scmp.eq.s32.totalorder %s22, 1
    %p176 = por %p174, %p175
    %p178 = scmp.ne.s32.totalorder %s163, %s177
    %p179 = scmp.eq.s32.totalorder %s22, 0
    %p180 = por %p178, %p179
    %s182 = sadd.s32 %s181, 1
    %p185 = scmp.eq.s32.totalorder %s16, 1
    %p186 = scmp.ne.s32.totalorder %s181, %s183
    %p187 = scmp.eq.s32.totalorder %s16, 0
    %p188 = por %p186, %p187
    %p189 = scmp.ne.s32.totalorder %s181, %s183
    %p190 = scmp.eq.s32.totalorder %s21, 1
    %p191 = por %p189, %p190
    %p192 = scmp.ne.s32.totalorder %s183, %s184
    %p193 = scmp.eq.s32.totalorder %s21, 0
    %p194 = por %p192, %p193
    %p195 = scmp.ne.s32.totalorder %s183, %s184
    %p196 = scmp.eq.s32.totalorder %s22, 1
    %p197 = por %p195, %p196
    %p199 = scmp.ne.s32.totalorder %s184, %s198
    %p200 = scmp.eq.s32.totalorder %s22, 0
    %p201 = por %p199, %p200
    %s202 = ssub.s32 %s16, %s23
    %p203 = scmp.eq.s32.totalorder %s202, 0
    %s205 = sadd.s32 %s204, 1
    %s206 = scalar_select %p203, %s204, %s205
    %p209 = pneg %p203
    %p210 = scmp.eq.s32.totalorder %s16, 1
    %p211 = por %p209, %p210
    %p212 = scmp.ne.s32.totalorder %s204, %s207
    %p213 = scmp.eq.s32.totalorder %s16, 0
    %p214 = por %p212, %p213
    %p215 = scmp.ne.s32.totalorder %s204, %s207
    %p216 = scmp.eq.s32.totalorder %s21, 1
    %p217 = por %p215, %p216
    %p218 = scmp.ne.s32.totalorder %s207, %s208
    %p219 = scmp.eq.s32.totalorder %s21, 0
    %p220 = por %p218, %p219
    %p221 = scmp.ne.s32.totalorder %s207, %s208
    %p222 = scmp.eq.s32.totalorder %s22, 1
    %p223 = por %p221, %p222
    %p225 = scmp.ne.s32.totalorder %s208, %s224
    %p226 = scmp.eq.s32.totalorder %s22, 0
    %p227 = por %p225, %p226
    %s228 = ssub.s32 %s16, %s23
    %p229 = scmp.eq.s32.totalorder %s228, 0
    %s231 = sadd.s32 %s230, 1
    %s232 = scalar_select %p229, %s230, %s231
    %p235 = pneg %p229
    %p236 = scmp.eq.s32.totalorder %s16, 1
    %p237 = por %p235, %p236
    %p238 = scmp.ne.s32.totalorder %s230, %s233
    %p239 = scmp.eq.s32.totalorder %s16, 0
    %p240 = por %p238, %p239
    %p241 = scmp.ne.s32.totalorder %s230, %s233
    %p242 = scmp.eq.s32.totalorder %s21, 1
    %p243 = por %p241, %p242
    %p244 = scmp.ne.s32.totalorder %s233, %s234
    %p245 = scmp.eq.s32.totalorder %s21, 0
    %p246 = por %p244, %p245
    %p247 = scmp.ne.s32.totalorder %s233, %s234
    %p248 = scmp.eq.s32.totalorder %s22, 1
    %p249 = por %p247, %p248
    %p251 = scmp.ne.s32.totalorder %s234, %s250
    %p252 = scmp.eq.s32.totalorder %s22, 0
    %p253 = por %p251, %p252
    %p254 = scmp.le.s32.totalorder 1, %s16
    %p255 = scmp.lt.s32.totalorder %s16, 3
    %p256 = pnand %p254, %p255
    %p257 = pneg %p256
    // Predicated region
    $region9: #{decoder_module_forward.1} parent=5 // pred_check
      _
    $region10: #{decoder_module_forward.1} parent=5 // pred_check_branch
      %259 = sbr.rel (%p256) target = $region12
    $region11: #{decoder_module_forward.1} parent=5 // pred_region
      %s260 = ssub.s32 %s16, 1
      // Predicated region
      $region13: #{decoder_module_forward.1} parent=11 // pred_check
        %p261 = pneg %p89
      $region14: #{decoder_module_forward.1} parent=11 // pred_check_branch
        %263 = sbr.rel (%p261) target = $region16
      $region15: #{decoder_module_forward.1} parent=11 // pred_region
        _
      $region16: #{decoder_module_forward.1} parent=11 // pred_fallthru
        _
      // Predicated region
      $region17: #{decoder_module_forward.1} parent=11 // pred_check
        %p264 = pneg %p110
      $region18: #{decoder_module_forward.1} parent=11 // pred_check_branch
        %266 = sbr.rel (%p264) target = $region20
      $region19: #{decoder_module_forward.1} parent=11 // pred_region
        _
      $region20: #{decoder_module_forward.1} parent=11 // pred_fallthru
        _
      // Predicated region
      $region21: #{decoder_module_forward.1} parent=11 // pred_check
        %p267 = pneg %p131
      $region22: #{decoder_module_forward.1} parent=11 // pred_check_branch
        %269 = sbr.rel (%p267) target = $region24
      $region23: #{decoder_module_forward.1} parent=11 // pred_region
        _
      $region24: #{decoder_module_forward.1} parent=11 // pred_fallthru
        _
      // Predicated region
      $region25: #{decoder_module_forward.1} parent=11 // pred_check
        %p270 = pneg %p152
      $region26: #{decoder_module_forward.1} parent=11 // pred_check_branch
        %272 = sbr.rel (%p270) target = $region28
      $region27: #{decoder_module_forward.1} parent=11 // pred_region
        _
      $region28: #{decoder_module_forward.1} parent=11 // pred_fallthru
        _
      // Predicated region
      $region29: #{decoder_module_forward.1} parent=11 // pred_check
        %p273 = pneg %p173
      $region30: #{decoder_module_forward.1} parent=11 // pred_check_branch
        %275 = sbr.rel (%p273) target = $region32
      $region31: #{decoder_module_forward.1} parent=11 // pred_region
        _
      $region32: #{decoder_module_forward.1} parent=11 // pred_fallthru
        _
      // Predicated region
      $region33: #{decoder_module_forward.1} parent=11 // pred_check
        %p276 = pneg %p194
      $region34: #{decoder_module_forward.1} parent=11 // pred_check_branch
        %278 = sbr.rel (%p276) target = $region36
      $region35: #{decoder_module_forward.1} parent=11 // pred_region
        _
      $region36: #{decoder_module_forward.1} parent=11 // pred_fallthru
        _
    $region12: #{decoder_module_forward.1} parent=5 // pred_fallthru
      _
    %p279 = scmp.lt.s32.totalorder %s16, 2
    // Predicated region
    $region37: #{decoder_module_forward.1} parent=5 // pred_check
      %p280 = pneg %p279
    $region38: #{decoder_module_forward.1} parent=5 // pred_check_branch
      %282 = sbr.rel (%p280) target = $region40
    $region39: #{decoder_module_forward.1} parent=5 // pred_region
      // Predicated region
      $region41: #{decoder_module_forward.1} parent=39 // pred_check
        %p283 = pneg %p36
      $region42: #{decoder_module_forward.1} parent=39 // pred_check_branch
        %285 = sbr.rel (%p283) target = $region44
      $region43: #{decoder_module_forward.1} parent=39 // pred_region
        %p286 = scmp.lt.s32.totalorder %s16, 1
        %s287 = scalar_select %p286, %s16, 1
        %s288 = smul.addr %s287, 64
        %s289 = smul.addr %s288, 8
        %s290 = scalar_lea.vmem %s0, %s289
      $region44: #{decoder_module_forward.1} parent=39 // pred_fallthru
        _
      // Predicated region
      $region45: #{decoder_module_forward.1} parent=39 // pred_check
        %p291 = pneg %p62
      $region46: #{decoder_module_forward.1} parent=39 // pred_check_branch
        %293 = sbr.rel (%p291) target = $region48
      $region47: #{decoder_module_forward.1} parent=39 // pred_region
        %p294 = scmp.lt.s32.totalorder %s16, 1
        %s295 = scalar_select %p294, %s16, 1
        %s296 = smul.addr %s295, 64
        %s297 = smul.addr %s296, 8
        %s298 = scalar_lea.vmem %s1, %s297
      $region48: #{decoder_module_forward.1} parent=39 // pred_fallthru
        _
    $region40: #{decoder_module_forward.1} parent=5 // pred_fallthru
      _
    %p299 = scmp.le.s32.totalorder 1, %s16
    %p300 = scmp.lt.s32.totalorder %s16, 3
    %p301 = pnand %p299, %p300
    %p302 = pneg %p301
    // Predicated region
    $region49: #{decoder_module_forward.1} parent=5 // pred_check
      _
    $region50: #{decoder_module_forward.1} parent=5 // pred_check_branch
      %304 = sbr.rel (%p301) target = $region52
    $region51: #{decoder_module_forward.1} parent=5 // pred_region
      %s305 = ssub.s32 %s16, 1
      %p306 = scmp.lt.s32.totalorder %s21, 1
      %s307 = scalar_select %p306, %s21, 1
      %s308 = smul.addr %s307, 64
      %s309 = smul.addr %s308, 8
      %s310 = scalar_lea.vmem %s0, %s309
      %p311 = pneg %p42
      %p312 = pneg %p39
      %p313 = scmp.lt.s32.totalorder %s21, 1
      %s314 = scalar_select %p313, %s21, 1
      %s315 = smul.addr %s314, 64
      %s316 = smul.addr %s315, 8
      %s317 = scalar_lea.vmem %s1, %s316
      %p318 = pneg %p68
      %p319 = pneg %p65
      %p320 = pneg %p89
      %p321 = pneg %p86
      %p322 = pneg %p110
      %p323 = pneg %p107
      %p324 = pneg %p131
      %p325 = pneg %p128
      %p326 = pneg %p152
      %p327 = pneg %p149
      %p328 = pneg %p173
      %p329 = pneg %p170
      %p330 = pneg %p194
      %p331 = pneg %p191
      %p332 = pneg %p220
      %p333 = pneg %p217
      %p334 = scmp.lt.s32.totalorder %s21, 1
      %s335 = scalar_select %p334, %s21, 1
      %s336 = smul.addr %s335, 6
      %s337 = smul.addr %s336, 8
      %s338 = scalar_lea.vmem %s8, %s337
      %p339 = pneg %p246
      %p340 = pneg %p243
      %p341 = scmp.lt.s32.totalorder %s21, 1
      %s342 = scalar_select %p341, %s21, 1
      %s343 = smul.addr %s342, 64
      %s344 = smul.addr %s343, 8
      %s345 = scalar_lea.vmem %s9, %s344
      %p346 = scmp.lt.s32.totalorder %s21, 1
      %s347 = scalar_select %p346, %s21, 1
      %s348 = smul.addr %s347, 64
      %s349 = smul.addr %s348, 8
      %s350 = scalar_lea.vmem %s0, %s349
      %p351 = scmp.lt.s32.totalorder %s21, 1
      %s352 = scalar_select %p351, %s21, 1
      %s353 = smul.addr %s352, 64
      %s354 = smul.addr %s353, 8
      %s355 = scalar_lea.vmem %s1, %s354
      %p356 = scmp.lt.s32.totalorder %s21, 1
      %s357 = scalar_select %p356, %s21, 1
      %s358 = smul.addr %s357, 6
      %s359 = smul.addr %s358, 8
      %s360 = scalar_lea.vmem %s8, %s359
      %p361 = scmp.lt.s32.totalorder %s21, 1
      %s362 = scalar_select %p361, %s21, 1
      %s363 = smul.addr %s362, 64
      %s364 = smul.addr %s363, 8
      %s365 = scalar_lea.vmem %s9, %s364
      %v367 = vld [vmem:[%s350] sm:$0xff]
      %v368 = vld [vmem:[%s350 + $0x8] sm:$0xff]
      %v369 = vld [vmem:[%s350 + $0x10] sm:$0xff]
      %v370 = vld [vmem:[%s350 + $0x18] sm:$0xff]
      %v371 = vld [vmem:[%s350 + $0x20] sm:$0xff]
      %v372 = vld [vmem:[%s350 + $0x28] sm:$0xff]
      %v373 = vld [vmem:[%s350 + $0x30] sm:$0xff]
      %v374 = vld [vmem:[%s350 + $0x38] sm:$0xff]
      %v375 = vld [vmem:[%s350 + $0x40] sm:$0xff]
      %v376 = vld [vmem:[%s350 + $0x48] sm:$0xff]
      %v377 = vld [vmem:[%s350 + $0x50] sm:$0xff]
      %v378 = vld [vmem:[%s350 + $0x58] sm:$0xff]
      %v379 = vld [vmem:[%s350 + $0x60] sm:$0xff]
      %v380 = vld [vmem:[%s350 + $0x68] sm:$0xff]
      %v381 = vld [vmem:[%s350 + $0x70] sm:$0xff]
      %v382 = vld [vmem:[%s350 + $0x78] sm:$0xff]
      %v383 = vld [vmem:[%s350 + $0x80] sm:$0xff]
      %v384 = vld [vmem:[%s350 + $0x88] sm:$0xff]
      %v385 = vld [vmem:[%s350 + $0x90] sm:$0xff]
      %v386 = vld [vmem:[%s350 + $0x98] sm:$0xff]
      %v387 = vld [vmem:[%s350 + $0xa0] sm:$0xff]
      %v388 = vld [vmem:[%s350 + $0xa8] sm:$0xff]
      %v389 = vld [vmem:[%s350 + $0xb0] sm:$0xff]
      %v390 = vld [vmem:[%s350 + $0xb8] sm:$0xff]
      %v391 = vld [vmem:[%s350 + $0xc0] sm:$0xff]
      %v392 = vld [vmem:[%s350 + $0xc8] sm:$0xff]
      %v393 = vld [vmem:[%s350 + $0xd0] sm:$0xff]
      %v394 = vld [vmem:[%s350 + $0xd8] sm:$0xff]
      %v395 = vld [vmem:[%s350 + $0xe0] sm:$0xff]
      %v396 = vld [vmem:[%s350 + $0xe8] sm:$0xff]
      %v397 = vld [vmem:[%s350 + $0xf0] sm:$0xff]
      %v398 = vld [vmem:[%s350 + $0xf8] sm:$0xff]
      %v399 = vld [vmem:[%s350 + $0x100] sm:$0xff]
      %v400 = vld [vmem:[%s350 + $0x108] sm:$0xff]
      %v401 = vld [vmem:[%s350 + $0x110] sm:$0xff]
      %v402 = vld [vmem:[%s350 + $0x118] sm:$0xff]
      %v403 = vld [vmem:[%s350 + $0x120] sm:$0xff]
      %v404 = vld [vmem:[%s350 + $0x128] sm:$0xff]
      %v405 = vld [vmem:[%s350 + $0x130] sm:$0xff]
      %v406 = vld [vmem:[%s350 + $0x138] sm:$0xff]
      %v407 = vld [vmem:[%s350 + $0x140] sm:$0xff]
      %v408 = vld [vmem:[%s350 + $0x148] sm:$0xff]
      %v409 = vld [vmem:[%s350 + $0x150] sm:$0xff]
      %v410 = vld [vmem:[%s350 + $0x158] sm:$0xff]
      %v411 = vld [vmem:[%s350 + $0x160] sm:$0xff]
      %v412 = vld [vmem:[%s350 + $0x168] sm:$0xff]
      %v413 = vld [vmem:[%s350 + $0x170] sm:$0xff]
      %v414 = vld [vmem:[%s350 + $0x178] sm:$0xff]
      %v415 = vld [vmem:[%s350 + $0x180] sm:$0xff]
      %v416 = vld [vmem:[%s350 + $0x188] sm:$0xff]
      %v417 = vld [vmem:[%s350 + $0x190] sm:$0xff]
      %v418 = vld [vmem:[%s350 + $0x198] sm:$0xff]
      %v419 = vld [vmem:[%s350 + $0x1a0] sm:$0xff]
      %v420 = vld [vmem:[%s350 + $0x1a8] sm:$0xff]
      %v421 = vld [vmem:[%s350 + $0x1b0] sm:$0xff]
      %v422 = vld [vmem:[%s350 + $0x1b8] sm:$0xff]
      %v423 = vld [vmem:[%s350 + $0x1c0] sm:$0xff]
      %v424 = vld [vmem:[%s350 + $0x1c8] sm:$0xff]
      %v425 = vld [vmem:[%s350 + $0x1d0] sm:$0xff]
      %v426 = vld [vmem:[%s350 + $0x1d8] sm:$0xff]
      %v427 = vld [vmem:[%s350 + $0x1e0] sm:$0xff]
      %v428 = vld [vmem:[%s350 + $0x1e8] sm:$0xff]
      %v429 = vld [vmem:[%s350 + $0x1f0] sm:$0xff]
      %v430 = vld [vmem:[%s350 + $0x1f8] sm:$0xff]
      %v431 = vpack.c.bf16 %v368, %v367
      %v432 = vpack.c.bf16 %v370, %v369
      %v433 = vpack.c.bf16 %v372, %v371
      %v434 = vpack.c.bf16 %v374, %v373
      %v435 = vpack.c.bf16 %v376, %v375
      %v436 = vpack.c.bf16 %v378, %v377
      %v437 = vpack.c.bf16 %v380, %v379
      %v438 = vpack.c.bf16 %v382, %v381
      %v439 = vpack.c.bf16 %v384, %v383
      %v440 = vpack.c.bf16 %v386, %v385
      %v441 = vpack.c.bf16 %v388, %v387
      %v442 = vpack.c.bf16 %v390, %v389
      %v443 = vpack.c.bf16 %v392, %v391
      %v444 = vpack.c.bf16 %v394, %v393
      %v445 = vpack.c.bf16 %v396, %v395
      %v446 = vpack.c.bf16 %v398, %v397
      %v447 = vpack.c.bf16 %v400, %v399
      %v448 = vpack.c.bf16 %v402, %v401
      %v449 = vpack.c.bf16 %v404, %v403
      %v450 = vpack.c.bf16 %v406, %v405
      %v451 = vpack.c.bf16 %v408, %v407
      %v452 = vpack.c.bf16 %v410, %v409
      %v453 = vpack.c.bf16 %v412, %v411
      %v454 = vpack.c.bf16 %v414, %v413
      %v455 = vpack.c.bf16 %v416, %v415
      %v456 = vpack.c.bf16 %v418, %v417
      %v457 = vpack.c.bf16 %v420, %v419
      %v458 = vpack.c.bf16 %v422, %v421
      %v459 = vpack.c.bf16 %v424, %v423
      %v460 = vpack.c.bf16 %v426, %v425
      %v461 = vpack.c.bf16 %v428, %v427
      %v462 = vpack.c.bf16 %v430, %v429
      %v463 = vld [vmem:[%s355] sm:$0xff]
      %v464 = vld [vmem:[%s355 + $0x8] sm:$0xff]
      %v465 = vld [vmem:[%s355 + $0x10] sm:$0xff]
      %v466 = vld [vmem:[%s355 + $0x18] sm:$0xff]
      %v467 = vld [vmem:[%s355 + $0x20] sm:$0xff]
      %v468 = vld [vmem:[%s355 + $0x28] sm:$0xff]
      %v469 = vld [vmem:[%s355 + $0x30] sm:$0xff]
      %v470 = vld [vmem:[%s355 + $0x38] sm:$0xff]
      %v471 = vld [vmem:[%s355 + $0x40] sm:$0xff]
      %v472 = vld [vmem:[%s355 + $0x48] sm:$0xff]
      %v473 = vld [vmem:[%s355 + $0x50] sm:$0xff]
      %v474 = vld [vmem:[%s355 + $0x58] sm:$0xff]
      %v475 = vld [vmem:[%s355 + $0x60] sm:$0xff]
      %v476 = vld [vmem:[%s355 + $0x68] sm:$0xff]
      %v477 = vld [vmem:[%s355 + $0x70] sm:$0xff]
      %v478 = vld [vmem:[%s355 + $0x78] sm:$0xff]
      %v479 = vld [vmem:[%s355 + $0x80] sm:$0xff]
      %v480 = vld [vmem:[%s355 + $0x88] sm:$0xff]
      %v481 = vld [vmem:[%s355 + $0x90] sm:$0xff]
      %v482 = vld [vmem:[%s355 + $0x98] sm:$0xff]
      %v483 = vld [vmem:[%s355 + $0xa0] sm:$0xff]
      %v484 = vld [vmem:[%s355 + $0xa8] sm:$0xff]
      %v485 = vld [vmem:[%s355 + $0xb0] sm:$0xff]
      %v486 = vld [vmem:[%s355 + $0xb8] sm:$0xff]
      %v487 = vld [vmem:[%s355 + $0xc0] sm:$0xff]
      %v488 = vld [vmem:[%s355 + $0xc8] sm:$0xff]
      %v489 = vld [vmem:[%s355 + $0xd0] sm:$0xff]
      %v490 = vld [vmem:[%s355 + $0xd8] sm:$0xff]
      %v491 = vld [vmem:[%s355 + $0xe0] sm:$0xff]
      %v492 = vld [vmem:[%s355 + $0xe8] sm:$0xff]
      %v493 = vld [vmem:[%s355 + $0xf0] sm:$0xff]
      %v494 = vld [vmem:[%s355 + $0xf8] sm:$0xff]
      %v495 = vld [vmem:[%s355 + $0x100] sm:$0xff]
      %v496 = vld [vmem:[%s355 + $0x108] sm:$0xff]
      %v497 = vld [vmem:[%s355 + $0x110] sm:$0xff]
      %v498 = vld [vmem:[%s355 + $0x118] sm:$0xff]
      %v499 = vld [vmem:[%s355 + $0x120] sm:$0xff]
      %v500 = vld [vmem:[%s355 + $0x128] sm:$0xff]
      %v501 = vld [vmem:[%s355 + $0x130] sm:$0xff]
      %v502 = vld [vmem:[%s355 + $0x138] sm:$0xff]
      %v503 = vld [vmem:[%s355 + $0x140] sm:$0xff]
      %v504 = vld [vmem:[%s355 + $0x148] sm:$0xff]
      %v505 = vld [vmem:[%s355 + $0x150] sm:$0xff]
      %v506 = vld [vmem:[%s355 + $0x158] sm:$0xff]
      %v507 = vld [vmem:[%s355 + $0x160] sm:$0xff]
      %v508 = vld [vmem:[%s355 + $0x168] sm:$0xff]
      %v509 = vld [vmem:[%s355 + $0x170] sm:$0xff]
      %v510 = vld [vmem:[%s355 + $0x178] sm:$0xff]
      %v511 = vld [vmem:[%s355 + $0x180] sm:$0xff]
      %v512 = vld [vmem:[%s355 + $0x188] sm:$0xff]
      %v513 = vld [vmem:[%s355 + $0x190] sm:$0xff]
      %v514 = vld [vmem:[%s355 + $0x198] sm:$0xff]
      %v515 = vld [vmem:[%s355 + $0x1a0] sm:$0xff]
      %v516 = vld [vmem:[%s355 + $0x1a8] sm:$0xff]
      %v517 = vld [vmem:[%s355 + $0x1b0] sm:$0xff]
      %v518 = vld [vmem:[%s355 + $0x1b8] sm:$0xff]
      %v519 = vld [vmem:[%s355 + $0x1c0] sm:$0xff]
      %v520 = vld [vmem:[%s355 + $0x1c8] sm:$0xff]
      %v521 = vld [vmem:[%s355 + $0x1d0] sm:$0xff]
      %v522 = vld [vmem:[%s355 + $0x1d8] sm:$0xff]
      %v523 = vld [vmem:[%s355 + $0x1e0] sm:$0xff]
      %v524 = vld [vmem:[%s355 + $0x1e8] sm:$0xff]
      %v525 = vld [vmem:[%s355 + $0x1f0] sm:$0xff]
      %v526 = vld [vmem:[%s355 + $0x1f8] sm:$0xff]
      %v527 = vpack.c.bf16 %v465, %v463
      %v528 = vpack.c.bf16 %v466, %v464
      %v529 = vpack.c.bf16 %v469, %v467
      %v530 = vpack.c.bf16 %v470, %v468
      %v531 = vpack.c.bf16 %v473, %v471
      %v532 = vpack.c.bf16 %v474, %v472
      %v533 = vpack.c.bf16 %v477, %v475
      %v534 = vpack.c.bf16 %v478, %v476
      %v535 = vpack.c.bf16 %v481, %v479
      %v536 = vpack.c.bf16 %v482, %v480
      %v537 = vpack.c.bf16 %v485, %v483
      %v538 = vpack.c.bf16 %v486, %v484
      %v539 = vpack.c.bf16 %v489, %v487
      %v540 = vpack.c.bf16 %v490, %v488
      %v541 = vpack.c.bf16 %v493, %v491
      %v542 = vpack.c.bf16 %v494, %v492
      %v543 = vpack.c.bf16 %v497, %v495
      %v544 = vpack.c.bf16 %v498, %v496
      %v545 = vpack.c.bf16 %v501, %v499
      %v546 = vpack.c.bf16 %v502, %v500
      %v547 = vpack.c.bf16 %v505, %v503
      %v548 = vpack.c.bf16 %v506, %v504
      %v549 = vpack.c.bf16 %v509, %v507
      %v550 = vpack.c.bf16 %v510, %v508
      %v551 = vpack.c.bf16 %v513, %v511
      %v552 = vpack.c.bf16 %v514, %v512
      %v553 = vpack.c.bf16 %v517, %v515
      %v554 = vpack.c.bf16 %v518, %v516
      %v555 = vpack.c.bf16 %v521, %v519
      %v556 = vpack.c.bf16 %v522, %v520
      %v557 = vpack.c.bf16 %v525, %v523
      %v558 = vpack.c.bf16 %v526, %v524
      %v559 = vld [vmem:[%s3] sm:$0xff]
      %v560 = vld [vmem:[%s3 + $0x8] sm:$0xff]
      %v561 = vld [vmem:[%s3 + $0x10] sm:$0xff]
      %v562 = vld [vmem:[%s3 + $0x18] sm:$0xff]
      %v563 = vld [vmem:[%s3 + $0x20] sm:$0xff]
      %v564 = vld [vmem:[%s3 + $0x28] sm:$0xff]
      %v565 = vld [vmem:[%s3 + $0x30] sm:$0xff]
      %v566 = vld [vmem:[%s3 + $0x38] sm:$0xff]
      %v567 = vld [vmem:[%s3 + $0x40] sm:$0xff]
      %v568 = vld [vmem:[%s3 + $0x48] sm:$0xff]
      %v569 = vld [vmem:[%s3 + $0x50] sm:$0xff]
      %v570 = vld [vmem:[%s3 + $0x58] sm:$0xff]
      %v571 = vld [vmem:[%s3 + $0x60] sm:$0xff]
      %v572 = vld [vmem:[%s3 + $0x68] sm:$0xff]
      %v573 = vld [vmem:[%s3 + $0x70] sm:$0xff]
      %v574 = vld [vmem:[%s3 + $0x78] sm:$0xff]
      %v575 = vld [vmem:[%s3 + $0x80] sm:$0xff]
      %v576 = vld [vmem:[%s3 + $0x88] sm:$0xff]
      %v577 = vld [vmem:[%s3 + $0x90] sm:$0xff]
      %v578 = vld [vmem:[%s3 + $0x98] sm:$0xff]
      %v579 = vld [vmem:[%s3 + $0xa0] sm:$0xff]
      %v580 = vld [vmem:[%s3 + $0xa8] sm:$0xff]
      %v581 = vld [vmem:[%s3 + $0xb0] sm:$0xff]
      %v582 = vld [vmem:[%s3 + $0xb8] sm:$0xff]
      %v583 = vld [vmem:[%s3 + $0xc0] sm:$0xff]
      %v584 = vld [vmem:[%s3 + $0xc8] sm:$0xff]
      %v585 = vld [vmem:[%s3 + $0xd0] sm:$0xff]
      %v586 = vld [vmem:[%s3 + $0xd8] sm:$0xff]
      %v587 = vld [vmem:[%s3 + $0xe0] sm:$0xff]
      %v588 = vld [vmem:[%s3 + $0xe8] sm:$0xff]
      %v589 = vld [vmem:[%s3 + $0xf0] sm:$0xff]
      %v590 = vld [vmem:[%s3 + $0xf8] sm:$0xff]
      %v591 = vld [vmem:[%s3 + $0x100] sm:$0xff]
      %v592 = vld [vmem:[%s3 + $0x108] sm:$0xff]
      %v593 = vld [vmem:[%s3 + $0x110] sm:$0xff]
      %v594 = vld [vmem:[%s3 + $0x118] sm:$0xff]
      %v595 = vld [vmem:[%s3 + $0x120] sm:$0xff]
      %v596 = vld [vmem:[%s3 + $0x128] sm:$0xff]
      %v597 = vld [vmem:[%s3 + $0x130] sm:$0xff]
      %v598 = vld [vmem:[%s3 + $0x138] sm:$0xff]
      %v599 = vld [vmem:[%s3 + $0x140] sm:$0xff]
      %v600 = vld [vmem:[%s3 + $0x148] sm:$0xff]
      %v601 = vld [vmem:[%s3 + $0x150] sm:$0xff]
      %v602 = vld [vmem:[%s3 + $0x158] sm:$0xff]
      %v603 = vld [vmem:[%s3 + $0x160] sm:$0xff]
      %v604 = vld [vmem:[%s3 + $0x168] sm:$0xff]
      %v605 = vld [vmem:[%s3 + $0x170] sm:$0xff]
      %v606 = vld [vmem:[%s3 + $0x178] sm:$0xff]
      %v607 = vld [vmem:[%s3 + $0x180] sm:$0xff]
      %v608 = vld [vmem:[%s3 + $0x188] sm:$0xff]
      %v609 = vld [vmem:[%s3 + $0x190] sm:$0xff]
      %v610 = vld [vmem:[%s3 + $0x198] sm:$0xff]
      %v611 = vld [vmem:[%s3 + $0x1a0] sm:$0xff]
      %v612 = vld [vmem:[%s3 + $0x1a8] sm:$0xff]
      %v613 = vld [vmem:[%s3 + $0x1b0] sm:$0xff]
      %v614 = vld [vmem:[%s3 + $0x1b8] sm:$0xff]
      %v615 = vld [vmem:[%s3 + $0x1c0] sm:$0xff]
      %v616 = vld [vmem:[%s3 + $0x1c8] sm:$0xff]
      %v617 = vld [vmem:[%s3 + $0x1d0] sm:$0xff]
      %v618 = vld [vmem:[%s3 + $0x1d8] sm:$0xff]
      %v619 = vld [vmem:[%s3 + $0x1e0] sm:$0xff]
      %v620 = vld [vmem:[%s3 + $0x1e8] sm:$0xff]
      %v621 = vld [vmem:[%s3 + $0x1f0] sm:$0xff]
      %v622 = vld [vmem:[%s3 + $0x1f8] sm:$0xff]
      %v687 = vunpack.c.l.b16 %v559
      %v688 = vunpack.c.h.b16 %v559
      %v689 = vunpack.c.l.b16 %v560
      %v690 = vunpack.c.h.b16 %v560
      %v691 = vunpack.c.l.b16 %v561
      %v692 = vunpack.c.h.b16 %v561
      %v693 = vunpack.c.l.b16 %v562
      %v694 = vunpack.c.h.b16 %v562
      %v695 = vunpack.c.l.b16 %v563
      %v696 = vunpack.c.h.b16 %v563
      %v697 = vunpack.c.l.b16 %v564
      %v698 = vunpack.c.h.b16 %v564
      %v699 = vunpack.c.l.b16 %v565
      %v700 = vunpack.c.h.b16 %v565
      %v701 = vunpack.c.l.b16 %v566
      %v702 = vunpack.c.h.b16 %v566
      %v703 = vunpack.c.l.b16 %v567
      %v704 = vunpack.c.h.b16 %v567
      %v705 = vunpack.c.l.b16 %v568
      %v706 = vunpack.c.h.b16 %v568
      %v707 = vunpack.c.l.b16 %v569
      %v708 = vunpack.c.h.b16 %v569
      %v709 = vunpack.c.l.b16 %v570
      %v710 = vunpack.c.h.b16 %v570
      %v711 = vunpack.c.l.b16 %v571
      %v712 = vunpack.c.h.b16 %v571
      %v713 = vunpack.c.l.b16 %v572
      %v714 = vunpack.c.h.b16 %v572
      %v715 = vunpack.c.l.b16 %v573
      %v716 = vunpack.c.h.b16 %v573
      %v717 = vunpack.c.l.b16 %v574
      %v718 = vunpack.c.h.b16 %v574
      %v719 = vunpack.c.l.b16 %v575
      %v720 = vunpack.c.h.b16 %v575
      %v721 = vunpack.c.l.b16 %v576
      %v722 = vunpack.c.h.b16 %v576
      %v723 = vunpack.c.l.b16 %v577
      %v724 = vunpack.c.h.b16 %v577
      %v725 = vunpack.c.l.b16 %v578
      %v726 = vunpack.c.h.b16 %v578
      %v727 = vunpack.c.l.b16 %v579
      %v728 = vunpack.c.h.b16 %v579
      %v729 = vunpack.c.l.b16 %v580
      %v730 = vunpack.c.h.b16 %v580
      %v731 = vunpack.c.l.b16 %v581
      %v732 = vunpack.c.h.b16 %v581
      %v733 = vunpack.c.l.b16 %v582
      %v734 = vunpack.c.h.b16 %v582
      %v735 = vunpack.c.l.b16 %v583
      %v736 = vunpack.c.h.b16 %v583
      %v737 = vunpack.c.l.b16 %v584
      %v738 = vunpack.c.h.b16 %v584
      %v739 = vunpack.c.l.b16 %v585
      %v740 = vunpack.c.h.b16 %v585
      %v741 = vunpack.c.l.b16 %v586
      %v742 = vunpack.c.h.b16 %v586
      %v743 = vunpack.c.l.b16 %v587
      %v744 = vunpack.c.h.b16 %v587
      %v745 = vunpack.c.l.b16 %v588
      %v746 = vunpack.c.h.b16 %v588
      %v747 = vunpack.c.l.b16 %v589
      %v748 = vunpack.c.h.b16 %v589
      %v749 = vunpack.c.l.b16 %v590
      %v750 = vunpack.c.h.b16 %v590
      %v751 = vunpack.c.l.b16 %v591
      %v752 = vunpack.c.h.b16 %v591
      %v753 = vunpack.c.l.b16 %v592
      %v754 = vunpack.c.h.b16 %v592
      %v755 = vunpack.c.l.b16 %v593
      %v756 = vunpack.c.h.b16 %v593
      %v757 = vunpack.c.l.b16 %v594
      %v758 = vunpack.c.h.b16 %v594
      %v759 = vunpack.c.l.b16 %v595
      %v760 = vunpack.c.h.b16 %v595
      %v761 = vunpack.c.l.b16 %v596
      %v762 = vunpack.c.h.b16 %v596
      %v763 = vunpack.c.l.b16 %v597
      %v764 = vunpack.c.h.b16 %v597
      %v765 = vunpack.c.l.b16 %v598
      %v766 = vunpack.c.h.b16 %v598
      %v767 = vunpack.c.l.b16 %v599
      %v768 = vunpack.c.h.b16 %v599
      %v769 = vunpack.c.l.b16 %v600
      %v770 = vunpack.c.h.b16 %v600
      %v771 = vunpack.c.l.b16 %v601
      %v772 = vunpack.c.h.b16 %v601
      %v773 = vunpack.c.l.b16 %v602
      %v774 = vunpack.c.h.b16 %v602
      %v775 = vunpack.c.l.b16 %v603
      %v776 = vunpack.c.h.b16 %v603
      %v777 = vunpack.c.l.b16 %v604
      %v778 = vunpack.c.h.b16 %v604
      %v779 = vunpack.c.l.b16 %v605
      %v780 = vunpack.c.h.b16 %v605
      %v781 = vunpack.c.l.b16 %v606
      %v782 = vunpack.c.h.b16 %v606
      %v783 = vunpack.c.l.b16 %v607
      %v784 = vunpack.c.h.b16 %v607
      %v785 = vunpack.c.l.b16 %v608
      %v786 = vunpack.c.h.b16 %v608
      %v787 = vunpack.c.l.b16 %v609
      %v788 = vunpack.c.h.b16 %v609
      %v789 = vunpack.c.l.b16 %v610
      %v790 = vunpack.c.h.b16 %v610
      %v791 = vunpack.c.l.b16 %v611
      %v792 = vunpack.c.h.b16 %v611
      %v793 = vunpack.c.l.b16 %v612
      %v794 = vunpack.c.h.b16 %v612
      %v795 = vunpack.c.l.b16 %v613
      %v796 = vunpack.c.h.b16 %v613
      %v797 = vunpack.c.l.b16 %v614
      %v798 = vunpack.c.h.b16 %v614
      %v799 = vunpack.c.l.b16 %v615
      %v800 = vunpack.c.h.b16 %v615
      %v801 = vunpack.c.l.b16 %v616
      %v802 = vunpack.c.h.b16 %v616
      %v803 = vunpack.c.l.b16 %v617
      %v804 = vunpack.c.h.b16 %v617
      %v805 = vunpack.c.l.b16 %v618
      %v806 = vunpack.c.h.b16 %v618
      %v807 = vunpack.c.l.b16 %v619
      %v808 = vunpack.c.h.b16 %v619
      %v809 = vunpack.c.l.b16 %v620
      %v810 = vunpack.c.h.b16 %v620
      %v811 = vunpack.c.l.b16 %v621
      %v812 = vunpack.c.h.b16 %v621
      %v813 = vunpack.c.l.b16 %v622
      %v814 = vunpack.c.h.b16 %v622
      %v815 = vpack.c.b16 %v691, %v687
      %v816 = vpack.c.b16 %v692, %v688
      %v817 = vpack.c.b16 %v693, %v689
      %v818 = vpack.c.b16 %v694, %v690
      %v819 = vpack.c.b16 %v699, %v695
      %v820 = vpack.c.b16 %v700, %v696
      %v821 = vpack.c.b16 %v701, %v697
      %v822 = vpack.c.b16 %v702, %v698
      %v823 = vpack.c.b16 %v707, %v703
      %v824 = vpack.c.b16 %v708, %v704
      %v825 = vpack.c.b16 %v709, %v705
      %v826 = vpack.c.b16 %v710, %v706
      %v827 = vpack.c.b16 %v715, %v711
      %v828 = vpack.c.b16 %v716, %v712
      %v829 = vpack.c.b16 %v717, %v713
      %v830 = vpack.c.b16 %v718, %v714
      %v831 = vpack.c.b16 %v723, %v719
      %v832 = vpack.c.b16 %v724, %v720
      %v833 = vpack.c.b16 %v725, %v721
      %v834 = vpack.c.b16 %v726, %v722
      %v835 = vpack.c.b16 %v731, %v727
      %v836 = vpack.c.b16 %v732, %v728
      %v837 = vpack.c.b16 %v733, %v729
      %v838 = vpack.c.b16 %v734, %v730
      %v839 = vpack.c.b16 %v739, %v735
      %v840 = vpack.c.b16 %v740, %v736
      %v841 = vpack.c.b16 %v741, %v737
      %v842 = vpack.c.b16 %v742, %v738
      %v843 = vpack.c.b16 %v747, %v743
      %v844 = vpack.c.b16 %v748, %v744
      %v845 = vpack.c.b16 %v749, %v745
      %v846 = vpack.c.b16 %v750, %v746
      %v847 = vpack.c.b16 %v755, %v751
      %v848 = vpack.c.b16 %v756, %v752
      %v849 = vpack.c.b16 %v757, %v753
      %v850 = vpack.c.b16 %v758, %v754
      %v851 = vpack.c.b16 %v763, %v759
      %v852 = vpack.c.b16 %v764, %v760
      %v853 = vpack.c.b16 %v765, %v761
      %v854 = vpack.c.b16 %v766, %v762
      %v855 = vpack.c.b16 %v771, %v767
      %v856 = vpack.c.b16 %v772, %v768
      %v857 = vpack.c.b16 %v773, %v769
      %v858 = vpack.c.b16 %v774, %v770
      %v859 = vpack.c.b16 %v779, %v775
      %v860 = vpack.c.b16 %v780, %v776
      %v861 = vpack.c.b16 %v781, %v777
      %v862 = vpack.c.b16 %v782, %v778
      %v863 = vpack.c.b16 %v787, %v783
      %v864 = vpack.c.b16 %v788, %v784
      %v865 = vpack.c.b16 %v789, %v785
      %v866 = vpack.c.b16 %v790, %v786
      %v867 = vpack.c.b16 %v795, %v791
      %v868 = vpack.c.b16 %v796, %v792
      %v869 = vpack.c.b16 %v797, %v793
      %v870 = vpack.c.b16 %v798, %v794
      %v871 = vpack.c.b16 %v803, %v799
      %v872 = vpack.c.b16 %v804, %v800
      %v873 = vpack.c.b16 %v805, %v801
      %v874 = vpack.c.b16 %v806, %v802
      %v875 = vpack.c.b16 %v811, %v807
      %v876 = vpack.c.b16 %v812, %v808
      %v877 = vpack.c.b16 %v813, %v809
      %v878 = vpack.c.b16 %v814, %v810
      %943 = vmatprep.subr.bf16.mxu0 0
      %944 = vmatpush1.bf16.msra.mxu0 %v431
      %945 = vmatprep.subr.bf16.mxu0 0
      %946 = vmatpush1.bf16.msra.mxu0 %v432
      %947 = vmatprep.subr.bf16.mxu0 0
      %948 = vmatpush1.bf16.msra.mxu0 %v433
      %949 = vmatprep.subr.bf16.mxu0 0
      %950 = vmatpush1.bf16.msra.mxu0 %v434
      %951 = vmatprep.subr.bf16.mxu0 0
      %952 = vmatpush1.bf16.msra.mxu0 %v435
      %953 = vmatprep.subr.bf16.mxu0 0
      %954 = vmatpush1.bf16.msra.mxu0 %v436
      %955 = vmatprep.subr.bf16.mxu0 0
      %956 = vmatpush1.bf16.msra.mxu0 %v437
      %957 = vmatprep.subr.bf16.mxu0 0
      %958 = vmatpush1.bf16.msra.mxu0 %v438
      %959 = vmatprep.subr.bf16.mxu0 0
      %960 = vmatpush1.bf16.msra.mxu0 %v439
      %961 = vmatprep.subr.bf16.mxu0 0
      %962 = vmatpush1.bf16.msra.mxu0 %v440
      %963 = vmatprep.subr.bf16.mxu0 0
      %964 = vmatpush1.bf16.msra.mxu0 %v441
      %965 = vmatprep.subr.bf16.mxu0 0
      %966 = vmatpush1.bf16.msra.mxu0 %v442
      %967 = vmatprep.subr.bf16.mxu0 0
      %968 = vmatpush1.bf16.msra.mxu0 %v443
      %969 = vmatprep.subr.bf16.mxu0 0
      %970 = vmatpush1.bf16.msra.mxu0 %v444
      %971 = vmatprep.subr.bf16.mxu0 0
      %972 = vmatpush1.bf16.msra.mxu0 %v445
      %973 = vmatprep.subr.bf16.mxu0 0
      %974 = vmatpush1.bf16.msra.mxu0 %v446
      %975 = vmatprep.mubr.bf16.mxu0 %v816
      %976 = vmatmul.mubr.bf16.gmra.mrb[0].mxu0 %v815
      %v977 = vpop.f32.mrb[0].mxu0
      %v978 = vadd.f32 0.0, %v977
      %v979 = vpop.f32.mrb[0].mxu0
      %v980 = vpop.f32.mrb[0].mxu0
      %v981 = vadd.f32 0.0, %v980
      %v982 = vpop.f32.mrb[0].mxu0
      %983 = vmatprep.mubr.bf16.mxu0 %v820
      %984 = vmatmul.mubr.bf16.gmra.mrb[0].mxu0 %v819
      %v985 = vpop.f32.mrb[0].mxu0
      %v986 = vadd.f32 0.0, %v985
      %v987 = vpop.f32.mrb[0].mxu0
      %v988 = vpop.f32.mrb[0].mxu0
      %v989 = vadd.f32 0.0, %v988
      %v990 = vpop.f32.mrb[0].mxu0
      %991 = vmatprep.mubr.bf16.mxu0 %v824
      %992 = vmatmul.mubr.bf16.gmra.mrb[0].mxu0 %v823
      %v993 = vpop.f32.mrb[0].mxu0
      %v994 = vadd.f32 0.0, %v993
      %v995 = vpop.f32.mrb[0].mxu0
      %v996 = vpop.f32.mrb[0].mxu0
      %v997 = vadd.f32 0.0, %v996
      %v998 = vpop.f32.mrb[0].mxu0
      %999 = vmatprep.mubr.bf16.mxu0 %v828
      %1000 = vmatmul.mubr.bf16.gmra.mrb[0].mxu0 %v827
      %v1001 = vpop.f32.mrb[0].mxu0
      %v1002 = vadd.f32 0.0, %v1001
      %v1003 = vpop.f32.mrb[0].mxu0
      %v1004 = vpop.f32.mrb[0].mxu0
      %v1005 = vadd.f32 0.0, %v1004
      %v1006 = vpop.f32.mrb[0].mxu0
      %1007 = vmatprep.mubr.bf16.mxu0 %v832
      %1008 = vmatmul.mubr.bf16.gmra.mrb[0].mxu0 %v831
      %v1009 = vpop.f32.mrb[0].mxu0
      %v1010 = vadd.f32 0.0, %v1009
      %v1011 = vpop.f32.mrb[0].mxu0
      %v1012 = vpop.f32.mrb[0].mxu0
      %v1013 = vadd.f32 0.0, %v1012
      %v1014 = vpop.f32.mrb[0].mxu0
      %1015 = vmatprep.mubr.bf16.mxu0 %v836
      %1016 = vmatmul.mubr.bf16.gmra.mrb[0].mxu0 %v835
      %v1017 = vpop.f32.mrb[0].mxu0
      %v1018 = vadd.f32 0.0, %v1017
      %v1019 = vpop.f32.mrb[0].mxu0
      %v1020 = vpop.f32.mrb[0].mxu0
      %v1021 = vadd.f32 0.0, %v1020
      %v1022 = vpop.f32.mrb[0].mxu0
      %1023 = vmatprep.mubr.bf16.mxu0 %v840
      %1024 = vmatmul.mubr.bf16.gmra.mrb[0].mxu0 %v839
      %v1025 = vpop.f32.mrb[0].mxu0
      %v1026 = vadd.f32 0.0, %v1025
      %v1027 = vpop.f32.mrb[0].mxu0
      %v1028 = vpop.f32.mrb[0].mxu0
      %v1029 = vadd.f32 0.0, %v1028
      %v1030 = vpop.f32.mrb[0].mxu0
      %1031 = vmatprep.mubr.bf16.mxu0 %v844
      %1032 = vmatmul.mubr.bf16.gmra.mrb[0].mxu0 %v843
      %v1033 = vpop.f32.mrb[0].mxu0
      %v1034 = vadd.f32 0.0, %v1033
      %v1035 = vpop.f32.mrb[0].mxu0
      %v1036 = vpop.f32.mrb[0].mxu0
      %v1037 = vadd.f32 0.0, %v1036
      %v1038 = vpop.f32.mrb[0].mxu0
      %1039 = vmatprep.mubr.bf16.mxu0 %v848
      %1040 = vmatmul.mubr.bf16.gmra.mrb[0].mxu0 %v847
      %v1041 = vpop.f32.mrb[0].mxu0
      %v1042 = vadd.f32 0.0, %v1041
      %v1043 = vpop.f32.mrb[0].mxu0
      %v1044 = vpop.f32.mrb[0].mxu0
      %v1045 = vadd.f32 0.0, %v1044
      %v1046 = vpop.f32.mrb[0].mxu0
      %1047 = vmatprep.mubr.bf16.mxu0 %v852
      %1048 = vmatmul.mubr.bf16.gmra.mrb[0].mxu0 %v851
      %v1049 = vpop.f32.mrb[0].mxu0
      %v1050 = vadd.f32 0.0, %v1049
      %v1051 = vpop.f32.mrb[0].mxu0
      %v1052 = vpop.f32.mrb[0].mxu0
      %v1053 = vadd.f32 0.0, %v1052
      %v1054 = vpop.f32.mrb[0].mxu0
      %1055 = vmatprep.mubr.bf16.mxu0 %v856
      %1056 = vmatmul.mubr.bf16.gmra.mrb[0].mxu0 %v855
      %v1057 = vpop.f32.mrb[0].mxu0
      %v1058 = vadd.f32 0.0, %v1057
      %v1059 = vpop.f32.mrb[0].mxu0
      %v1060 = vpop.f32.mrb[0].mxu0
      %v1061 = vadd.f32 0.0, %v1060
      %v1062 = vpop.f32.mrb[0].mxu0
      %1063 = vmatprep.mubr.bf16.mxu0 %v860
      %1064 = vmatmul.mubr.bf16.gmra.mrb[0].mxu0 %v859
      %v1065 = vpop.f32.mrb[0].mxu0
      %v1066 = vadd.f32 0.0, %v1065
      %v1067 = vpop.f32.mrb[0].mxu0
      %v1068 = vpop.f32.mrb[0].mxu0
      %v1069 = vadd.f32 0.0, %v1068
      %v1070 = vpop.f32.mrb[0].mxu0
      %1071 = vmatprep.mubr.bf16.mxu0 %v864
      %1072 = vmatmul.mubr.bf16.gmra.mrb[0].mxu0 %v863
      %v1073 = vpop.f32.mrb[0].mxu0
      %v1074 = vadd.f32 0.0, %v1073
      %v1075 = vpop.f32.mrb[0].mxu0
      %v1076 = vpop.f32.mrb[0].mxu0
      %v1077 = vadd.f32 0.0, %v1076
      %v1078 = vpop.f32.mrb[0].mxu0
      %1079 = vmatprep.mubr.bf16.mxu0 %v868
      %1080 = vmatmul.mubr.bf16.gmra.mrb[0].mxu0 %v867
      %v1081 = vpop.f32.mrb[0].mxu0
      %v1082 = vadd.f32 0.0, %v1081
      %v1083 = vpop.f32.mrb[0].mxu0
      %v1084 = vpop.f32.mrb[0].mxu0
      %v1085 = vadd.f32 0.0, %v1084
      %v1086 = vpop.f32.mrb[0].mxu0
      %1087 = vmatprep.mubr.bf16.mxu0 %v872
      %1088 = vmatmul.mubr.bf16.gmra.mrb[0].mxu0 %v871
      %v1089 = vpop.f32.mrb[0].mxu0
      %v1090 = vadd.f32 0.0, %v1089
      %v1091 = vpop.f32.mrb[0].mxu0
      %v1092 = vpop.f32.mrb[0].mxu0
      %v1093 = vadd.f32 0.0, %v1092
      %v1094 = vpop.f32.mrb[0].mxu0
      %1095 = vmatprep.mubr.bf16.mxu0 %v876
      %1096 = vmatmul.mubr.bf16.gmra.mrb[0].mxu0 %v875
      %v1097 = vpop.f32.mrb[0].mxu0
      %v1098 = vadd.f32 0.0, %v1097
      %v1099 = vpop.f32.mrb[0].mxu0
      %v1100 = vpop.f32.mrb[0].mxu0
      %v1101 = vadd.f32 0.0, %v1100
      %v1102 = vpop.f32.mrb[0].mxu0
      %1103 = vdwg.mxu0
      %1104 = vmatprep.subr.bf16.mxu0 0
      %1105 = vmatpush1.bf16.msra.mxu0 %v447
      %1106 = vmatprep.subr.bf16.mxu0 0
      %1107 = vmatpush1.bf16.msra.mxu0 %v448
      %1108 = vmatprep.subr.bf16.mxu0 0
      %1109 = vmatpush1.bf16.msra.mxu0 %v449
      %1110 = vmatprep.subr.bf16.mxu0 0
      %1111 = vmatpush1.bf16.msra.mxu0 %v450
      %1112 = vmatprep.subr.bf16.mxu0 0
      %1113 = vmatpush1.bf16.msra.mxu0 %v451
      %1114 = vmatprep.subr.bf16.mxu0 0
      %1115 = vmatpush1.bf16.msra.mxu0 %v452
      %1116 = vmatprep.subr.bf16.mxu0 0
      %1117 = vmatpush1.bf16.msra.mxu0 %v453
      %1118 = vmatprep.subr.bf16.mxu0 0
      %1119 = vmatpush1.bf16.msra.mxu0 %v454
      %1120 = vmatprep.subr.bf16.mxu0 0
      %1121 = vmatpush1.bf16.msra.mxu0 %v455
      %1122 = vmatprep.subr.bf16.mxu0 0
      %1123 = vmatpush1.bf16.msra.mxu0 %v456
      %1124 = vmatprep.subr.bf16.mxu0 0
      %1125 = vmatpush1.bf16.msra.mxu0 %v457
      %1126 = vmatprep.subr.bf16.mxu0 0
      %1127 = vmatpush1.bf16.msra.mxu0 %v458
      %1128 = vmatprep.subr.bf16.mxu0 0
      %1129 = vmatpush1.bf16.msra.mxu0 %v459
      %1130 = vmatprep.subr.bf16.mxu0 0
      %1131 = vmatpush1.bf16.msra.mxu0 %v460
      %1132 = vmatprep.subr.bf16.mxu0 0
      %1133 = vmatpush1.bf16.msra.mxu0 %v461
      %1134 = vmatprep.subr.bf16.mxu0 0
      %1135 = vmatpush1.bf16.msra.mxu0 %v462
      %1136 = vmatprep.mubr.bf16.mxu0 %v818
      %1137 = vmatmul.mubr.bf16.gmra.mrb[0].mxu0 %v817
      %v1138 = vpop.f32.mrb[0].mxu0
      %v1139 = vadd.f32 %v978, %v1138
      %v1140 = vpop.f32.mrb[0].mxu0
      %v1141 = vpop.f32.mrb[0].mxu0
      %v1142 = vadd.f32 %v981, %v1141
      %v1143 = vpop.f32.mrb[0].mxu0
      %1144 = vmatprep.mubr.bf16.mxu0 %v822
      %1145 = vmatmul.mubr.bf16.gmra.mrb[0].mxu0 %v821
      %v1146 = vpop.f32.mrb[0].mxu0
      %v1147 = vadd.f32 %v986, %v1146
      %v1148 = vpop.f32.mrb[0].mxu0
      %v1149 = vpop.f32.mrb[0].mxu0
      %v1150 = vadd.f32 %v989, %v1149
      %v1151 = vpop.f32.mrb[0].mxu0
      %1152 = vmatprep.mubr.bf16.mxu0 %v826
      %1153 = vmatmul.mubr.bf16.gmra.mrb[0].mxu0 %v825
      %v1154 = vpop.f32.mrb[0].mxu0
      %v1155 = vadd.f32 %v994, %v1154
      %v1156 = vpop.f32.mrb[0].mxu0
      %v1157 = vpop.f32.mrb[0].mxu0
      %v1158 = vadd.f32 %v997, %v1157
      %v1159 = vpop.f32.mrb[0].mxu0
      %1160 = vmatprep.mubr.bf16.mxu0 %v830
      %1161 = vmatmul.mubr.bf16.gmra.mrb[0].mxu0 %v829
      %v1162 = vpop.f32.mrb[0].mxu0
      %v1163 = vadd.f32 %v1002, %v1162
      %v1164 = vpop.f32.mrb[0].mxu0
      %v1165 = vpop.f32.mrb[0].mxu0
      %v1166 = vadd.f32 %v1005, %v1165
      %v1167 = vpop.f32.mrb[0].mxu0
      %1168 = vmatprep.mubr.bf16.mxu0 %v834
      %1169 = vmatmul.mubr.bf16.gmra.mrb[0].mxu0 %v833
      %v1170 = vpop.f32.mrb[0].mxu0
      %v1171 = vadd.f32 %v1010, %v1170
      %v1172 = vpop.f32.mrb[0].mxu0
      %v1173 = vpop.f32.mrb[0].mxu0
      %v1174 = vadd.f32 %v1013, %v1173
      %v1175 = vpop.f32.mrb[0].mxu0
      %1176 = vmatprep.mubr.bf16.mxu0 %v838
      %1177 = vmatmul.mubr.bf16.gmra.mrb[0].mxu0 %v837
      %v1178 = vpop.f32.mrb[0].mxu0
      %v1179 = vadd.f32 %v1018, %v1178
      %v1180 = vpop.f32.mrb[0].mxu0
      %v1181 = vpop.f32.mrb[0].mxu0
      %v1182 = vadd.f32 %v1021, %v1181
      %v1183 = vpop.f32.mrb[0].mxu0
      %1184 = vmatprep.mubr.bf16.mxu0 %v842
      %1185 = vmatmul.mubr.bf16.gmra.mrb[0].mxu0 %v841
      %v1186 = vpop.f32.mrb[0].mxu0
      %v1187 = vadd.f32 %v1026, %v1186
      %v1188 = vpop.f32.mrb[0].mxu0
      %v1189 = vpop.f32.mrb[0].mxu0
      %v1190 = vadd.f32 %v1029, %v1189
      %v1191 = vpop.f32.mrb[0].mxu0
      %1192 = vmatprep.mubr.bf16.mxu0 %v846
      %1193 = vmatmul.mubr.bf16.gmra.mrb[0].mxu0 %v845
      %v1194 = vpop.f32.mrb[0].mxu0
      %v1195 = vadd.f32 %v1034, %v1194
      %v1196 = vpop.f32.mrb[0].mxu0
      %v1197 = vpop.f32.mrb[0].mxu0
      %v1198 = vadd.f32 %v1037, %v1197
      %v1199 = vpop.f32.mrb[0].mxu0
      %1200 = vmatprep.mubr.bf16.mxu0 %v850
      %1201 = vmatmul.mubr.bf16.gmra.mrb[0].mxu0 %v849
      %v1202 = vpop.f32.mrb[0].mxu0
      %v1203 = vadd.f32 %v1042, %v1202
      %v1204 = vpop.f32.mrb[0].mxu0
      %v1205 = vpop.f32.mrb[0].mxu0
      %v1206 = vadd.f32 %v1045, %v1205
      %v1207 = vpop.f32.mrb[0].mxu0
      %1208 = vmatprep.mubr.bf16.mxu0 %v854
      %1209 = vmatmul.mubr.bf16.gmra.mrb[0].mxu0 %v853
      %v1210 = vpop.f32.mrb[0].mxu0
      %v1211 = vadd.f32 %v1050, %v1210
      %v1212 = vpop.f32.mrb[0].mxu0
      %v1213 = vpop.f32.mrb[0].mxu0
      %v1214 = vadd.f32 %v1053, %v1213
      %v1215 = vpop.f32.mrb[0].mxu0
      %1216 = vmatprep.mubr.bf16.mxu0 %v858
      %1217 = vmatmul.mubr.bf16.gmra.mrb[0].mxu0 %v857
      %v1218 = vpop.f32.mrb[0].mxu0
      %v1219 = vadd.f32 %v1058, %v1218
      %v1220 = vpop.f32.mrb[0].mxu0
      %v1221 = vpop.f32.mrb[0].mxu0
      %v1222 = vadd.f32 %v1061, %v1221
      %v1223 = vpop.f32.mrb[0].mxu0
      %1224 = vmatprep.mubr.bf16.mxu0 %v862
      %1225 = vmatmul.mubr.bf16.gmra.mrb[0].mxu0 %v861
      %v1226 = vpop.f32.mrb[0].mxu0
      %v1227 = vadd.f32 %v1066, %v1226
      %v1228 = vpop.f32.mrb[0].mxu0
      %v1229 = vpop.f32.mrb[0].mxu0
      %v1230 = vadd.f32 %v1069, %v1229
      %v1231 = vpop.f32.mrb[0].mxu0
      %1232 = vmatprep.mubr.bf16.mxu0 %v866
      %1233 = vmatmul.mubr.bf16.gmra.mrb[0].mxu0 %v865
      %v1234 = vpop.f32.mrb[0].mxu0
      %v1235 = vadd.f32 %v1074, %v1234
      %v1236 = vpop.f32.mrb[0].mxu0
      %v1237 = vpop.f32.mrb[0].mxu0
      %v1238 = vadd.f32 %v1077, %v1237
      %v1239 = vpop.f32.mrb[0].mxu0
      %1240 = vmatprep.mubr.bf16.mxu0 %v870
      %1241 = vmatmul.mubr.bf16.gmra.mrb[0].mxu0 %v869
      %v1242 = vpop.f32.mrb[0].mxu0
      %v1243 = vadd.f32 %v1082, %v1242
      %v1244 = vpop.f32.mrb[0].mxu0
      %v1245 = vpop.f32.mrb[0].mxu0
      %v1246 = vadd.f32 %v1085, %v1245
      %v1247 = vpop.f32.mrb[0].mxu0
      %1248 = vmatprep.mubr.bf16.mxu0 %v874
      %1249 = vmatmul.mubr.bf16.gmra.mrb[0].mxu0 %v873
      %v1250 = vpop.f32.mrb[0].mxu0
      %v1251 = vadd.f32 %v1090, %v1250
      %v1252 = vpop.f32.mrb[0].mxu0
      %v1253 = vpop.f32.mrb[0].mxu0
      %v1254 = vadd.f32 %v1093, %v1253
      %v1255 = vpop.f32.mrb[0].mxu0
      %1256 = vmatprep.mubr.bf16.mxu0 %v878
      %1257 = vmatmul.mubr.bf16.gmra.mrb[0].mxu0 %v877
      %v1258 = vpop.f32.mrb[0].mxu0
      %v1259 = vadd.f32 %v1098, %v1258
      %v1260 = vpop.f32.mrb[0].mxu0
      %v1261 = vpop.f32.mrb[0].mxu0
      %v1262 = vadd.f32 %v1101, %v1261
      %v1263 = vpop.f32.mrb[0].mxu0
      %1264 = vdwg.mxu0
      %v1265 = vpack.c.bf16 %v1142, %v1139
      %v1266 = vpack.c.bf16 %v1150, %v1147
      %v1267 = vpack.c.bf16 %v1158, %v1155
      %v1268 = vpack.c.bf16 %v1166, %v1163
      %v1269 = vpack.c.bf16 %v1174, %v1171
      %v1270 = vpack.c.bf16 %v1182, %v1179
      %v1271 = vpack.c.bf16 %v1190, %v1187
      %v1272 = vpack.c.bf16 %v1198, %v1195
      %v1273 = vpack.c.bf16 %v1206, %v1203
      %v1274 = vpack.c.bf16 %v1214, %v1211
      %v1275 = vpack.c.bf16 %v1222, %v1219
      %v1276 = vpack.c.bf16 %v1230, %v1227
      %v1277 = vpack.c.bf16 %v1238, %v1235
      %v1278 = vpack.c.bf16 %v1246, %v1243
      %v1279 = vpack.c.bf16 %v1254, %v1251
      %v1280 = vpack.c.bf16 %v1262, %v1259
      %v1281 = vld [vmem:[%s2] sm:$0xff]
      %v1282 = vld [vmem:[%s2 + $0x8] sm:$0xff]
      %v1283 = vld [vmem:[%s2 + $0x10] sm:$0xff]
      %v1284 = vld [vmem:[%s2 + $0x18] sm:$0xff]
      %v1285 = vld [vmem:[%s2 + $0x20] sm:$0xff]
      %v1286 = vld [vmem:[%s2 + $0x28] sm:$0xff]
      %v1287 = vld [vmem:[%s2 + $0x30] sm:$0xff]
      %v1288 = vld [vmem:[%s2 + $0x38] sm:$0xff]
      %v1289 = vld [vmem:[%s4] sm:$0xff]
      %v1290 = vld [vmem:[%s4 + $0x8] sm:$0xff]
      %v1291 = vld [vmem:[%s4 + $0x10] sm:$0xff]
      %v1292 = vld [vmem:[%s4 + $0x18] sm:$0xff]
      %v1293 = vld [vmem:[%s4 + $0x20] sm:$0xff]
      %v1294 = vld [vmem:[%s4 + $0x28] sm:$0xff]
      %v1301 = vunpack.c.l.b16 %v1289
      %v1302 = vunpack.c.h.b16 %v1289
      %v1303 = vunpack.c.l.b16 %v1290
      %v1304 = vunpack.c.h.b16 %v1290
      %v1305 = vunpack.c.l.b16 %v1291
      %v1306 = vunpack.c.h.b16 %v1291
      %v1307 = vunpack.c.l.b16 %v1292
      %v1308 = vunpack.c.h.b16 %v1292
      %v1309 = vunpack.c.l.b16 %v1293
      %v1310 = vunpack.c.h.b16 %v1293
      %v1311 = vunpack.c.l.b16 %v1294
      %v1312 = vunpack.c.h.b16 %v1294
      %v1313 = vpack.c.b16 %v1303, %v1301
      %v1314 = vpack.c.b16 %v1304, %v1302
      %v1315 = vpack.c.b16 %v1307, %v1305
      %v1316 = vpack.c.b16 %v1308, %v1306
      %v1317 = vpack.c.b16 %v1311, %v1309
      %v1318 = vpack.c.b16 %v1312, %v1310
      %1325 = vmatprep.subr.bf16.mxu0 %v528
      %1326 = vmatpush1.bf16.msra.mxu0 %v527
      %1327 = vmatprep.subr.bf16.mxu0 %v530
      %1328 = vmatpush1.bf16.msra.mxu0 %v529
      %1329 = vmatprep.subr.bf16.mxu0 %v532
      %1330 = vmatpush1.bf16.msra.mxu0 %v531
      %1331 = vmatprep.subr.bf16.mxu0 %v534
      %1332 = vmatpush1.bf16.msra.mxu0 %v533
      %1333 = vmatprep.subr.bf16.mxu0 %v536
      %1334 = vmatpush1.bf16.msra.mxu0 %v535
      %1335 = vmatprep.subr.bf16.mxu0 %v538
      %1336 = vmatpush1.bf16.msra.mxu0 %v537
      %1337 = vmatprep.subr.bf16.mxu0 %v540
      %1338 = vmatpush1.bf16.msra.mxu0 %v539
      %1339 = vmatprep.subr.bf16.mxu0 %v542
      %1340 = vmatpush1.bf16.msra.mxu0 %v541
      %1341 = vmatprep.subr.bf16.mxu0 %v544
      %1342 = vmatpush1.bf16.msra.mxu0 %v543
      %1343 = vmatprep.subr.bf16.mxu0 %v546
      %1344 = vmatpush1.bf16.msra.mxu0 %v545
      %1345 = vmatprep.subr.bf16.mxu0 %v548
      %1346 = vmatpush1.bf16.msra.mxu0 %v547
      %1347 = vmatprep.subr.bf16.mxu0 %v550
      %1348 = vmatpush1.bf16.msra.mxu0 %v549
      %1349 = vmatprep.subr.bf16.mxu0 %v552
      %1350 = vmatpush1.bf16.msra.mxu0 %v551
      %1351 = vmatprep.subr.bf16.mxu0 %v554
      %1352 = vmatpush1.bf16.msra.mxu0 %v553
      %1353 = vmatprep.subr.bf16.mxu0 %v556
      %1354 = vmatpush1.bf16.msra.mxu0 %v555
      %1355 = vmatprep.subr.bf16.mxu0 %v558
      %1356 = vmatpush1.bf16.msra.mxu0 %v557
      %1357 = vmatprep.mubr.bf16.mxu0 %v1314
      %1358 = vmatmul.mubr.bf16.gmra.mrb[0].mxu0 %v1313
      %v1359 = vpop.f32.mrb[0].mxu0
      %v1360 = vadd.f32 0.0, %v1359
      %v1361 = vpop.f32.mrb[0].mxu0
      %v1362 = vadd.f32 0.0, %v1361
      %v1363 = vpop.f32.mrb[0].mxu0
      %v1364 = vadd.f32 0.0, %v1363
      %v1365 = vpop.f32.mrb[0].mxu0
      %v1366 = vadd.f32 0.0, %v1365
      %1367 = vmatprep.mubr.bf16.mxu0 %v1316
      %1368 = vmatmul.mubr.bf16.gmra.mrb[0].mxu0 %v1315
      %v1369 = vpop.f32.mrb[0].mxu0
      %v1370 = vadd.f32 0.0, %v1369
      %v1371 = vpop.f32.mrb[0].mxu0
      %v1372 = vadd.f32 0.0, %v1371
      %v1373 = vpop.f32.mrb[0].mxu0
      %v1374 = vadd.f32 0.0, %v1373
      %v1375 = vpop.f32.mrb[0].mxu0
      %v1376 = vadd.f32 0.0, %v1375
      %1377 = vmatprep.mubr.bf16.mxu0 %v1318
      %1378 = vmatmul.mubr.bf16.gmra.mrb[0].mxu0 %v1317
      %v1379 = vpop.f32.mrb[0].mxu0
      %v1380 = vadd.f32 0.0, %v1379
      %v1381 = vpop.f32.mrb[0].mxu0
      %v1382 = vadd.f32 0.0, %v1381
      %v1383 = vpop.f32.mrb[0].mxu0
      %v1384 = vadd.f32 0.0, %v1383
      %v1385 = vpop.f32.mrb[0].mxu0
      %v1386 = vadd.f32 0.0, %v1385
      %1387 = vdwg.mxu0
      %v1388 = vld [vmem:[%s5] sm:$0xf]
      %v1389 = vld [vmem:[%s5 + $0x4] sm:$0xf]
      %v1390 = vld [vmem:[%s5 + $0x8] sm:$0xf]
      %v1391 = vld [vmem:[%s5 + $0xc] sm:$0xf]
      %v1392 = vld [vmem:[%s5 + $0x10] sm:$0xf]
      %v1393 = vld [vmem:[%s5 + $0x14] sm:$0xf]
      %v1394 = vld [vmem:[%s5 + $0x18] sm:$0xf]
      %v1395 = vld [vmem:[%s5 + $0x1c] sm:$0xf]
      %v1396 = vld [vmem:[%s5 + $0x20] sm:$0xf]
      %v1397 = vld [vmem:[%s5 + $0x24] sm:$0xf]
      %v1398 = vld [vmem:[%s5 + $0x28] sm:$0xf]
      %v1399 = vld [vmem:[%s5 + $0x2c] sm:$0xf]
      %v1400 = vld [vmem:[%s5 + $0x30] sm:$0xf]
      %v1401 = vld [vmem:[%s5 + $0x34] sm:$0xf]
      %v1402 = vld [vmem:[%s5 + $0x38] sm:$0xf]
      %v1403 = vld [vmem:[%s5 + $0x3c] sm:$0xf]
      %v1404 = vld [vmem:[%s5 + $0x40] sm:$0xf]
      %v1405 = vld [vmem:[%s5 + $0x44] sm:$0xf]
      %v1406 = vld [vmem:[%s5 + $0x48] sm:$0xf]
      %v1407 = vld [vmem:[%s5 + $0x4c] sm:$0xf]
      %v1408 = vld [vmem:[%s5 + $0x50] sm:$0xf]
      %v1409 = vld [vmem:[%s5 + $0x54] sm:$0xf]
      %v1410 = vld [vmem:[%s5 + $0x58] sm:$0xf]
      %v1411 = vld [vmem:[%s5 + $0x5c] sm:$0xf]
      %v1412 = vld [vmem:[%s5 + $0x60] sm:$0xf]
      %v1413 = vld [vmem:[%s5 + $0x64] sm:$0xf]
      %v1414 = vld [vmem:[%s5 + $0x68] sm:$0xf]
      %v1415 = vld [vmem:[%s5 + $0x6c] sm:$0xf]
      %v1416 = vld [vmem:[%s5 + $0x70] sm:$0xf]
      %v1417 = vld [vmem:[%s5 + $0x74] sm:$0xf]
      %v1418 = vld [vmem:[%s5 + $0x78] sm:$0xf]
      %v1419 = vld [vmem:[%s5 + $0x7c] sm:$0xf]
      %v1420 = vpack.c.bf16 %v1364, %v1360
      %v1421 = vpack.c.bf16 %v1366, %v1362
      %v1422 = vpack.c.bf16 %v1374, %v1370
      %v1423 = vpack.c.bf16 %v1376, %v1372
      %v1424 = vpack.c.bf16 %v1384, %v1380
      %v1425 = vpack.c.bf16 %v1386, %v1382
      %v1458 = vunpack.c.l.b16 %v1388
      %v1459 = vunpack.c.l.b16 %v1389
      %v1460 = vunpack.c.l.b16 %v1390
      %v1461 = vunpack.c.l.b16 %v1391
      %v1462 = vunpack.c.l.b16 %v1392
      %v1463 = vunpack.c.l.b16 %v1393
      %v1464 = vunpack.c.l.b16 %v1394
      %v1465 = vunpack.c.l.b16 %v1395
      %v1466 = vunpack.c.l.b16 %v1396
      %v1467 = vunpack.c.l.b16 %v1397
      %v1468 = vunpack.c.l.b16 %v1398
      %v1469 = vunpack.c.l.b16 %v1399
      %v1470 = vunpack.c.l.b16 %v1400
      %v1471 = vunpack.c.l.b16 %v1401
      %v1472 = vunpack.c.l.b16 %v1402
      %v1473 = vunpack.c.l.b16 %v1403
      %v1474 = vunpack.c.l.b16 %v1404
      %v1475 = vunpack.c.l.b16 %v1405
      %v1476 = vunpack.c.l.b16 %v1406
      %v1477 = vunpack.c.l.b16 %v1407
      %v1478 = vunpack.c.l.b16 %v1408
      %v1479 = vunpack.c.l.b16 %v1409
      %v1480 = vunpack.c.l.b16 %v1410
      %v1481 = vunpack.c.l.b16 %v1411
      %v1482 = vunpack.c.l.b16 %v1412
      %v1483 = vunpack.c.l.b16 %v1413
      %v1484 = vunpack.c.l.b16 %v1414
      %v1485 = vunpack.c.l.b16 %v1415
      %v1486 = vunpack.c.l.b16 %v1416
      %v1487 = vunpack.c.l.b16 %v1417
      %v1488 = vunpack.c.l.b16 %v1418
      %v1489 = vunpack.c.l.b16 %v1419
      %v1490 = vpack.c.b16 %v1459, %v1458
      %v1491 = vpack.c.b16 %v1461, %v1460
      %v1492 = vpack.c.b16 %v1463, %v1462
      %v1493 = vpack.c.b16 %v1465, %v1464
      %v1494 = vpack.c.b16 %v1467, %v1466
      %v1495 = vpack.c.b16 %v1469, %v1468
      %v1496 = vpack.c.b16 %v1471, %v1470
      %v1497 = vpack.c.b16 %v1473, %v1472
      %v1498 = vpack.c.b16 %v1475, %v1474
      %v1499 = vpack.c.b16 %v1477, %v1476
      %v1500 = vpack.c.b16 %v1479, %v1478
      %v1501 = vpack.c.b16 %v1481, %v1480
      %v1502 = vpack.c.b16 %v1483, %v1482
      %v1503 = vpack.c.b16 %v1485, %v1484
      %v1504 = vpack.c.b16 %v1487, %v1486
      %v1505 = vpack.c.b16 %v1489, %v1488
      %vm1506 = vcmask 392192
      %v1508 = vsel %vm1506, %v1490, 0
      %v1511 = vsel %vm1506, %v1491, 0
      %v1514 = vsel %vm1506, %v1492, 0
      %v1517 = vsel %vm1506, %v1493, 0
      %v1520 = vsel %vm1506, %v1494, 0
      %v1523 = vsel %vm1506, %v1495, 0
      %v1526 = vsel %vm1506, %v1496, 0
      %v1529 = vsel %vm1506, %v1497, 0
      %v1532 = vsel %vm1506, %v1498, 0
      %v1535 = vsel %vm1506, %v1499, 0
      %v1538 = vsel %vm1506, %v1500, 0
      %v1541 = vsel %vm1506, %v1501, 0
      %v1544 = vsel %vm1506, %v1502, 0
      %v1547 = vsel %vm1506, %v1503, 0
      %v1550 = vsel %vm1506, %v1504, 0
      %v1553 = vsel %vm1506, %v1505, 0
      %1555 = vmatprep.subr.bf16.mxu0 %v1421
      %1556 = vmatpush1.bf16.msra.mxu0 %v1420
      %1557 = vmatprep.subr.bf16.mxu0 %v1423
      %1558 = vmatpush1.bf16.msra.mxu0 %v1422
      %1559 = vmatprep.subr.bf16.mxu0 %v1425
      %1560 = vmatpush1.bf16.msra.mxu0 %v1424
      %1561 = vmatprep.subr.bf16.mxu0 0
      %1562 = vmatpush1.bf16.msra.mxu0 0
      %1563 = vmatprep.subr.bf16.mxu0 0
      %1564 = vmatpush1.bf16.msra.mxu0 0
      %1565 = vmatprep.subr.bf16.mxu0 0
      %1566 = vmatpush1.bf16.msra.mxu0 0
      %1567 = vmatprep.subr.bf16.mxu0 0
      %1568 = vmatpush1.bf16.msra.mxu0 0
      %1569 = vmatprep.subr.bf16.mxu0 0
      %1570 = vmatpush1.bf16.msra.mxu0 0
      %1571 = vmatprep.subr.bf16.mxu0 0
      %1572 = vmatpush1.bf16.msra.mxu0 0
      %1573 = vmatprep.subr.bf16.mxu0 0
      %1574 = vmatpush1.bf16.msra.mxu0 0
      %1575 = vmatprep.subr.bf16.mxu0 0
      %1576 = vmatpush1.bf16.msra.mxu0 0
      %1577 = vmatprep.subr.bf16.mxu0 0
      %1578 = vmatpush1.bf16.msra.mxu0 0
      %1579 = vmatprep.subr.bf16.mxu0 0
      %1580 = vmatpush1.bf16.msra.mxu0 0
      %1581 = vmatprep.subr.bf16.mxu0 0
      %1582 = vmatpush1.bf16.msra.mxu0 0
      %1583 = vmatprep.subr.bf16.mxu0 0
      %1584 = vmatpush1.bf16.msra.mxu0 0
      %1585 = vmatprep.subr.bf16.mxu0 0
      %1586 = vmatpush1.bf16.msra.mxu0 0
      %1587 = vmatprep.mubr.bf16.mxu0 0
      %1588 = vmatmul.mubr.bf16.gmra.mrb[0].mxu0 %v1508
      %v1589 = vpop.f32.mrb[0].mxu0
      %v1590 = vadd.f32 0.0, %v1589
      %v1591 = vpop.f32.mrb[0].mxu0
      %v1592 = vadd.f32 0.0, %v1591
      %v1593 = vpop.f32.mrb[0].mxu0
      %v1594 = vadd.f32 0.0, %v1593
      %v1595 = vpop.f32.mrb[0].mxu0
      %v1596 = vadd.f32 0.0, %v1595
      %1597 = vmatprep.mubr.bf16.mxu0 0
      %1598 = vmatmul.mubr.bf16.gmra.mrb[0].mxu0 %v1511
      %v1599 = vpop.f32.mrb[0].mxu0
      %v1600 = vadd.f32 0.0, %v1599
      %v1601 = vpop.f32.mrb[0].mxu0
      %v1602 = vadd.f32 0.0, %v1601
      %v1603 = vpop.f32.mrb[0].mxu0
      %v1604 = vadd.f32 0.0, %v1603
      %v1605 = vpop.f32.mrb[0].mxu0
      %v1606 = vadd.f32 0.0, %v1605
      %1607 = vmatprep.mubr.bf16.mxu0 0
      %1608 = vmatmul.mubr.bf16.gmra.mrb[0].mxu0 %v1514
      %v1609 = vpop.f32.mrb[0].mxu0
      %v1610 = vadd.f32 0.0, %v1609
      %v1611 = vpop.f32.mrb[0].mxu0
      %v1612 = vadd.f32 0.0, %v1611
      %v1613 = vpop.f32.mrb[0].mxu0
      %v1614 = vadd.f32 0.0, %v1613
      %v1615 = vpop.f32.mrb[0].mxu0
      %v1616 = vadd.f32 0.0, %v1615
      %1617 = vmatprep.mubr.bf16.mxu0 0
      %1618 = vmatmul.mubr.bf16.gmra.mrb[0].mxu0 %v1517
      %v1619 = vpop.f32.mrb[0].mxu0
      %v1620 = vadd.f32 0.0, %v1619
      %v1621 = vpop.f32.mrb[0].mxu0
      %v1622 = vadd.f32 0.0, %v1621
      %v1623 = vpop.f32.mrb[0].mxu0
      %v1624 = vadd.f32 0.0, %v1623
      %v1625 = vpop.f32.mrb[0].mxu0
      %v1626 = vadd.f32 0.0, %v1625
      %1627 = vmatprep.mubr.bf16.mxu0 0
      %1628 = vmatmul.mubr.bf16.gmra.mrb[0].mxu0 %v1520
      %v1629 = vpop.f32.mrb[0].mxu0
      %v1630 = vadd.f32 0.0, %v1629
      %v1631 = vpop.f32.mrb[0].mxu0
      %v1632 = vadd.f32 0.0, %v1631
      %v1633 = vpop.f32.mrb[0].mxu0
      %v1634 = vadd.f32 0.0, %v1633
      %v1635 = vpop.f32.mrb[0].mxu0
      %v1636 = vadd.f32 0.0, %v1635
      %1637 = vmatprep.mubr.bf16.mxu0 0
      %1638 = vmatmul.mubr.bf16.gmra.mrb[0].mxu0 %v1523
      %v1639 = vpop.f32.mrb[0].mxu0
      %v1640 = vadd.f32 0.0, %v1639
      %v1641 = vpop.f32.mrb[0].mxu0
      %v1642 = vadd.f32 0.0, %v1641
      %v1643 = vpop.f32.mrb[0].mxu0
      %v1644 = vadd.f32 0.0, %v1643
      %v1645 = vpop.f32.mrb[0].mxu0
      %v1646 = vadd.f32 0.0, %v1645
      %1647 = vmatprep.mubr.bf16.mxu0 0
      %1648 = vmatmul.mubr.bf16.gmra.mrb[0].mxu0 %v1526
      %v1649 = vpop.f32.mrb[0].mxu0
      %v1650 = vadd.f32 0.0, %v1649
      %v1651 = vpop.f32.mrb[0].mxu0
      %v1652 = vadd.f32 0.0, %v1651
      %v1653 = vpop.f32.mrb[0].mxu0
      %v1654 = vadd.f32 0.0, %v1653
      %v1655 = vpop.f32.mrb[0].mxu0
      %v1656 = vadd.f32 0.0, %v1655
      %1657 = vmatprep.mubr.bf16.mxu0 0
      %1658 = vmatmul.mubr.bf16.gmra.mrb[0].mxu0 %v1529
      %v1659 = vpop.f32.mrb[0].mxu0
      %v1660 = vadd.f32 0.0, %v1659
      %v1661 = vpop.f32.mrb[0].mxu0
      %v1662 = vadd.f32 0.0, %v1661
      %v1663 = vpop.f32.mrb[0].mxu0
      %v1664 = vadd.f32 0.0, %v1663
      %v1665 = vpop.f32.mrb[0].mxu0
      %v1666 = vadd.f32 0.0, %v1665
      %1667 = vmatprep.mubr.bf16.mxu0 0
      %1668 = vmatmul.mubr.bf16.gmra.mrb[0].mxu0 %v1532
      %v1669 = vpop.f32.mrb[0].mxu0
      %v1670 = vadd.f32 0.0, %v1669
      %v1671 = vpop.f32.mrb[0].mxu0
      %v1672 = vadd.f32 0.0, %v1671
      %v1673 = vpop.f32.mrb[0].mxu0
      %v1674 = vadd.f32 0.0, %v1673
      %v1675 = vpop.f32.mrb[0].mxu0
      %v1676 = vadd.f32 0.0, %v1675
      %1677 = vmatprep.mubr.bf16.mxu0 0
      %1678 = vmatmul.mubr.bf16.gmra.mrb[0].mxu0 %v1535
      %v1679 = vpop.f32.mrb[0].mxu0
      %v1680 = vadd.f32 0.0, %v1679
      %v1681 = vpop.f32.mrb[0].mxu0
      %v1682 = vadd.f32 0.0, %v1681
      %v1683 = vpop.f32.mrb[0].mxu0
      %v1684 = vadd.f32 0.0, %v1683
      %v1685 = vpop.f32.mrb[0].mxu0
      %v1686 = vadd.f32 0.0, %v1685
      %1687 = vmatprep.mubr.bf16.mxu0 0
      %1688 = vmatmul.mubr.bf16.gmra.mrb[0].mxu0 %v1538
      %v1689 = vpop.f32.mrb[0].mxu0
      %v1690 = vadd.f32 0.0, %v1689
      %v1691 = vpop.f32.mrb[0].mxu0
      %v1692 = vadd.f32 0.0, %v1691
      %v1693 = vpop.f32.mrb[0].mxu0
      %v1694 = vadd.f32 0.0, %v1693
      %v1695 = vpop.f32.mrb[0].mxu0
      %v1696 = vadd.f32 0.0, %v1695
      %1697 = vmatprep.mubr.bf16.mxu0 0
      %1698 = vmatmul.mubr.bf16.gmra.mrb[0].mxu0 %v1541
      %v1699 = vpop.f32.mrb[0].mxu0
      %v1700 = vadd.f32 0.0, %v1699
      %v1701 = vpop.f32.mrb[0].mxu0
      %v1702 = vadd.f32 0.0, %v1701
      %v1703 = vpop.f32.mrb[0].mxu0
      %v1704 = vadd.f32 0.0, %v1703
      %v1705 = vpop.f32.mrb[0].mxu0
      %v1706 = vadd.f32 0.0, %v1705
      %1707 = vmatprep.mubr.bf16.mxu0 0
      %1708 = vmatmul.mubr.bf16.gmra.mrb[0].mxu0 %v1544
      %v1709 = vpop.f32.mrb[0].mxu0
      %v1710 = vadd.f32 0.0, %v1709
      %v1711 = vpop.f32.mrb[0].mxu0
      %v1712 = vadd.f32 0.0, %v1711
      %v1713 = vpop.f32.mrb[0].mxu0
      %v1714 = vadd.f32 0.0, %v1713
      %v1715 = vpop.f32.mrb[0].mxu0
      %v1716 = vadd.f32 0.0, %v1715
      %1717 = vmatprep.mubr.bf16.mxu0 0
      %1718 = vmatmul.mubr.bf16.gmra.mrb[0].mxu0 %v1547
      %v1719 = vpop.f32.mrb[0].mxu0
      %v1720 = vadd.f32 0.0, %v1719
      %v1721 = vpop.f32.mrb[0].mxu0
      %v1722 = vadd.f32 0.0, %v1721
      %v1723 = vpop.f32.mrb[0].mxu0
      %v1724 = vadd.f32 0.0, %v1723
      %v1725 = vpop.f32.mrb[0].mxu0
      %v1726 = vadd.f32 0.0, %v1725
      %1727 = vmatprep.mubr.bf16.mxu0 0
      %1728 = vmatmul.mubr.bf16.gmra.mrb[0].mxu0 %v1550
      %v1729 = vpop.f32.mrb[0].mxu0
      %v1730 = vadd.f32 0.0, %v1729
      %v1731 = vpop.f32.mrb[0].mxu0
      %v1732 = vadd.f32 0.0, %v1731
      %v1733 = vpop.f32.mrb[0].mxu0
      %v1734 = vadd.f32 0.0, %v1733
      %v1735 = vpop.f32.mrb[0].mxu0
      %v1736 = vadd.f32 0.0, %v1735
      %1737 = vmatprep.mubr.bf16.mxu0 0
      %1738 = vmatmul.mubr.bf16.gmra.mrb[0].mxu0 %v1553
      %v1739 = vpop.f32.mrb[0].mxu0
      %v1740 = vadd.f32 0.0, %v1739
      %v1741 = vpop.f32.mrb[0].mxu0
      %v1742 = vadd.f32 0.0, %v1741
      %v1743 = vpop.f32.mrb[0].mxu0
      %v1744 = vadd.f32 0.0, %v1743
      %v1745 = vpop.f32.mrb[0].mxu0
      %v1746 = vadd.f32 0.0, %v1745
      %1747 = vdwg.mxu0
      %v1756 = vunpack.c.l.b16 %v1281
      %v1757 = vunpack.c.h.b16 %v1281
      %v1758 = vunpack.c.l.b16 %v1282
      %v1759 = vunpack.c.h.b16 %v1282
      %v1760 = vunpack.c.l.b16 %v1283
      %v1761 = vunpack.c.h.b16 %v1283
      %v1762 = vunpack.c.l.b16 %v1284
      %v1763 = vunpack.c.h.b16 %v1284
      %v1764 = vunpack.c.l.b16 %v1285
      %v1765 = vunpack.c.h.b16 %v1285
      %v1766 = vunpack.c.l.b16 %v1286
      %v1767 = vunpack.c.h.b16 %v1286
      %v1768 = vunpack.c.l.b16 %v1287
      %v1769 = vunpack.c.h.b16 %v1287
      %v1770 = vunpack.c.l.b16 %v1288
      %v1771 = vunpack.c.h.b16 %v1288
      %v1772 = vpack.c.b16 %v1758, %v1756
      %v1773 = vpack.c.b16 %v1759, %v1757
      %v1774 = vpack.c.b16 %v1762, %v1760
      %v1775 = vpack.c.b16 %v1763, %v1761
      %v1776 = vpack.c.b16 %v1766, %v1764
      %v1777 = vpack.c.b16 %v1767, %v1765
      %v1778 = vpack.c.b16 %v1770, %v1768
      %v1779 = vpack.c.b16 %v1771, %v1769
      %vm1788 = vcmask 523264
      %v1790 = vsel %vm1788, %v1265, 0
      %v1793 = vsel %vm1788, %v1266, 0
      %v1796 = vsel %vm1788, %v1267, 0
      %v1799 = vsel %vm1788, %v1268, 0
      %v1802 = vsel %vm1788, %v1269, 0
      %v1805 = vsel %vm1788, %v1270, 0
      %v1808 = vsel %vm1788, %v1271, 0
      %v1811 = vsel %vm1788, %v1272, 0
      %v1814 = vsel %vm1788, %v1273, 0
      %v1817 = vsel %vm1788, %v1274, 0
      %v1820 = vsel %vm1788, %v1275, 0
      %v1823 = vsel %vm1788, %v1276, 0
      %v1826 = vsel %vm1788, %v1277, 0
      %v1829 = vsel %vm1788, %v1278, 0
      %v1832 = vsel %vm1788, %v1279, 0
      %v1835 = vsel %vm1788, %v1280, 0
      %1837 = vmatprep.subr.bf16.mxu0 %v1773
      %1838 = vmatpush1.bf16.msra.mxu0 %v1772
      %1839 = vmatprep.subr.bf16.mxu0 %v1775
      %1840 = vmatpush1.bf16.msra.mxu0 %v1774
      %1841 = vmatprep.subr.bf16.mxu0 %v1777
      %1842 = vmatpush1.bf16.msra.mxu0 %v1776
      %1843 = vmatprep.subr.bf16.mxu0 %v1779
      %1844 = vmatpush1.bf16.msra.mxu0 %v1778
      %1845 = vmatprep.subr.bf16.mxu0 0
      %1846 = vmatpush1.bf16.msra.mxu0 0
      %1847 = vmatprep.subr.bf16.mxu0 0
      %1848 = vmatpush1.bf16.msra.mxu0 0
      %1849 = vmatprep.subr.bf16.mxu0 0
      %1850 = vmatpush1.bf16.msra.mxu0 0
      %1851 = vmatprep.subr.bf16.mxu0 0
      %1852 = vmatpush1.bf16.msra.mxu0 0
      %1853 = vmatprep.subr.bf16.mxu0 0
      %1854 = vmatpush1.bf16.msra.mxu0 0
      %1855 = vmatprep.subr.bf16.mxu0 0
      %1856 = vmatpush1.bf16.msra.mxu0 0
      %1857 = vmatprep.subr.bf16.mxu0 0
      %1858 = vmatpush1.bf16.msra.mxu0 0
      %1859 = vmatprep.subr.bf16.mxu0 0
      %1860 = vmatpush1.bf16.msra.mxu0 0
      %1861 = vmatprep.subr.bf16.mxu0 0
      %1862 = vmatpush1.bf16.msra.mxu0 0
      %1863 = vmatprep.subr.bf16.mxu0 0
      %1864 = vmatpush1.bf16.msra.mxu0 0
      %1865 = vmatprep.subr.bf16.mxu0 0
      %1866 = vmatpush1.bf16.msra.mxu0 0
      %1867 = vmatprep.subr.bf16.mxu0 0
      %1868 = vmatpush1.bf16.msra.mxu0 0
      %1869 = vmatprep.mubr.bf16.mxu0 0
      %1870 = vmatmul.mubr.bf16.gmra.mrb[0].mxu0 %v1790
      %v1871 = vpop.f32.mrb[0].mxu0
      %v1872 = vadd.f32 %v1590, %v1871
      %v1873 = vpop.f32.mrb[0].mxu0
      %v1874 = vadd.f32 %v1592, %v1873
      %v1875 = vpop.f32.mrb[0].mxu0
      %v1876 = vadd.f32 %v1594, %v1875
      %v1877 = vpop.f32.mrb[0].mxu0
      %v1878 = vadd.f32 %v1596, %v1877
      %1879 = vmatprep.mubr.bf16.mxu0 0
      %1880 = vmatmul.mubr.bf16.gmra.mrb[0].mxu0 %v1793
      %v1881 = vpop.f32.mrb[0].mxu0
      %v1882 = vadd.f32 %v1600, %v1881
      %v1883 = vpop.f32.mrb[0].mxu0
      %v1884 = vadd.f32 %v1602, %v1883
      %v1885 = vpop.f32.mrb[0].mxu0
      %v1886 = vadd.f32 %v1604, %v1885
      %v1887 = vpop.f32.mrb[0].mxu0
      %v1888 = vadd.f32 %v1606, %v1887
      %1889 = vmatprep.mubr.bf16.mxu0 0
      %1890 = vmatmul.mubr.bf16.gmra.mrb[0].mxu0 %v1796
      %v1891 = vpop.f32.mrb[0].mxu0
      %v1892 = vadd.f32 %v1610, %v1891
      %v1893 = vpop.f32.mrb[0].mxu0
      %v1894 = vadd.f32 %v1612, %v1893
      %v1895 = vpop.f32.mrb[0].mxu0
      %v1896 = vadd.f32 %v1614, %v1895
      %v1897 = vpop.f32.mrb[0].mxu0
      %v1898 = vadd.f32 %v1616, %v1897
      %1899 = vmatprep.mubr.bf16.mxu0 0
      %1900 = vmatmul.mubr.bf16.gmra.mrb[0].mxu0 %v1799
      %v1901 = vpop.f32.mrb[0].mxu0
      %v1902 = vadd.f32 %v1620, %v1901
      %v1903 = vpop.f32.mrb[0].mxu0
      %v1904 = vadd.f32 %v1622, %v1903
      %v1905 = vpop.f32.mrb[0].mxu0
      %v1906 = vadd.f32 %v1624, %v1905
      %v1907 = vpop.f32.mrb[0].mxu0
      %v1908 = vadd.f32 %v1626, %v1907
      %1909 = vmatprep.mubr.bf16.mxu0 0
      %1910 = vmatmul.mubr.bf16.gmra.mrb[0].mxu0 %v1802
      %v1911 = vpop.f32.mrb[0].mxu0
      %v1912 = vadd.f32 %v1630, %v1911
      %v1913 = vpop.f32.mrb[0].mxu0
      %v1914 = vadd.f32 %v1632, %v1913
      %v1915 = vpop.f32.mrb[0].mxu0
      %v1916 = vadd.f32 %v1634, %v1915
      %v1917 = vpop.f32.mrb[0].mxu0
      %v1918 = vadd.f32 %v1636, %v1917
      %1919 = vmatprep.mubr.bf16.mxu0 0
      %1920 = vmatmul.mubr.bf16.gmra.mrb[0].mxu0 %v1805
      %v1921 = vpop.f32.mrb[0].mxu0
      %v1922 = vadd.f32 %v1640, %v1921
      %v1923 = vpop.f32.mrb[0].mxu0
      %v1924 = vadd.f32 %v1642, %v1923
      %v1925 = vpop.f32.mrb[0].mxu0
      %v1926 = vadd.f32 %v1644, %v1925
      %v1927 = vpop.f32.mrb[0].mxu0
      %v1928 = vadd.f32 %v1646, %v1927
      %1929 = vmatprep.mubr.bf16.mxu0 0
      %1930 = vmatmul.mubr.bf16.gmra.mrb[0].mxu0 %v1808
      %v1931 = vpop.f32.mrb[0].mxu0
      %v1932 = vadd.f32 %v1650, %v1931
      %v1933 = vpop.f32.mrb[0].mxu0
      %v1934 = vadd.f32 %v1652, %v1933
      %v1935 = vpop.f32.mrb[0].mxu0
      %v1936 = vadd.f32 %v1654, %v1935
      %v1937 = vpop.f32.mrb[0].mxu0
      %v1938 = vadd.f32 %v1656, %v1937
      %1939 = vmatprep.mubr.bf16.mxu0 0
      %1940 = vmatmul.mubr.bf16.gmra.mrb[0].mxu0 %v1811
      %v1941 = vpop.f32.mrb[0].mxu0
      %v1942 = vadd.f32 %v1660, %v1941
      %v1943 = vpop.f32.mrb[0].mxu0
      %v1944 = vadd.f32 %v1662, %v1943
      %v1945 = vpop.f32.mrb[0].mxu0
      %v1946 = vadd.f32 %v1664, %v1945
      %v1947 = vpop.f32.mrb[0].mxu0
      %v1948 = vadd.f32 %v1666, %v1947
      %1949 = vmatprep.mubr.bf16.mxu0 0
      %1950 = vmatmul.mubr.bf16.gmra.mrb[0].mxu0 %v1814
      %v1951 = vpop.f32.mrb[0].mxu0
      %v1952 = vadd.f32 %v1670, %v1951
      %v1953 = vpop.f32.mrb[0].mxu0
      %v1954 = vadd.f32 %v1672, %v1953
      %v1955 = vpop.f32.mrb[0].mxu0
      %v1956 = vadd.f32 %v1674, %v1955
      %v1957 = vpop.f32.mrb[0].mxu0
      %v1958 = vadd.f32 %v1676, %v1957
      %1959 = vmatprep.mubr.bf16.mxu0 0
      %1960 = vmatmul.mubr.bf16.gmra.mrb[0].mxu0 %v1817
      %v1961 = vpop.f32.mrb[0].mxu0
      %v1962 = vadd.f32 %v1680, %v1961
      %v1963 = vpop.f32.mrb[0].mxu0
      %v1964 = vadd.f32 %v1682, %v1963
      %v1965 = vpop.f32.mrb[0].mxu0
      %v1966 = vadd.f32 %v1684, %v1965
      %v1967 = vpop.f32.mrb[0].mxu0
      %v1968 = vadd.f32 %v1686, %v1967
      %1969 = vmatprep.mubr.bf16.mxu0 0
      %1970 = vmatmul.mubr.bf16.gmra.mrb[0].mxu0 %v1820
      %v1971 = vpop.f32.mrb[0].mxu0
      %v1972 = vadd.f32 %v1690, %v1971
      %v1973 = vpop.f32.mrb[0].mxu0
      %v1974 = vadd.f32 %v1692, %v1973
      %v1975 = vpop.f32.mrb[0].mxu0
      %v1976 = vadd.f32 %v1694, %v1975
      %v1977 = vpop.f32.mrb[0].mxu0
      %v1978 = vadd.f32 %v1696, %v1977
      %1979 = vmatprep.mubr.bf16.mxu0 0
      %1980 = vmatmul.mubr.bf16.gmra.mrb[0].mxu0 %v1823
      %v1981 = vpop.f32.mrb[0].mxu0
      %v1982 = vadd.f32 %v1700, %v1981
      %v1983 = vpop.f32.mrb[0].mxu0
      %v1984 = vadd.f32 %v1702, %v1983
      %v1985 = vpop.f32.mrb[0].mxu0
      %v1986 = vadd.f32 %v1704, %v1985
      %v1987 = vpop.f32.mrb[0].mxu0
      %v1988 = vadd.f32 %v1706, %v1987
      %1989 = vmatprep.mubr.bf16.mxu0 0
      %1990 = vmatmul.mubr.bf16.gmra.mrb[0].mxu0 %v1826
      %v1991 = vpop.f32.mrb[0].mxu0
      %v1992 = vadd.f32 %v1710, %v1991
      %v1993 = vpop.f32.mrb[0].mxu0
      %v1994 = vadd.f32 %v1712, %v1993
      %v1995 = vpop.f32.mrb[0].mxu0
      %v1996 = vadd.f32 %v1714, %v1995
      %v1997 = vpop.f32.mrb[0].mxu0
      %v1998 = vadd.f32 %v1716, %v1997
      %1999 = vmatprep.mubr.bf16.mxu0 0
      %2000 = vmatmul.mubr.bf16.gmra.mrb[0].mxu0 %v1829
      %v2001 = vpop.f32.mrb[0].mxu0
      %v2002 = vadd.f32 %v1720, %v2001
      %v2003 = vpop.f32.mrb[0].mxu0
      %v2004 = vadd.f32 %v1722, %v2003
      %v2005 = vpop.f32.mrb[0].mxu0
      %v2006 = vadd.f32 %v1724, %v2005
      %v2007 = vpop.f32.mrb[0].mxu0
      %v2008 = vadd.f32 %v1726, %v2007
      %2009 = vmatprep.mubr.bf16.mxu0 0
      %2010 = vmatmul.mubr.bf16.gmra.mrb[0].mxu0 %v1832
      %v2011 = vpop.f32.mrb[0].mxu0
      %v2012 = vadd.f32 %v1730, %v2011
      %v2013 = vpop.f32.mrb[0].mxu0
      %v2014 = vadd.f32 %v1732, %v2013
      %v2015 = vpop.f32.mrb[0].mxu0
      %v2016 = vadd.f32 %v1734, %v2015
      %v2017 = vpop.f32.mrb[0].mxu0
      %v2018 = vadd.f32 %v1736, %v2017
      %2019 = vmatprep.mubr.bf16.mxu0 0
      %2020 = vmatmul.mubr.bf16.gmra.mrb[0].mxu0 %v1835
      %v2021 = vpop.f32.mrb[0].mxu0
      %v2022 = vadd.f32 %v1740, %v2021
      %v2023 = vpop.f32.mrb[0].mxu0
      %v2024 = vadd.f32 %v1742, %v2023
      %v2025 = vpop.f32.mrb[0].mxu0
      %v2026 = vadd.f32 %v1744, %v2025
      %v2027 = vpop.f32.mrb[0].mxu0
      %v2028 = vadd.f32 %v1746, %v2027
      %2029 = vdwg.mxu0
      %v2030 = vpack.c.bf16 %v1876, %v1872
      %v2031 = vpack.c.bf16 %v1878, %v1874
      %v2032 = vpack.c.bf16 %v1886, %v1882
      %v2033 = vpack.c.bf16 %v1888, %v1884
      %v2034 = vpack.c.bf16 %v1896, %v1892
      %v2035 = vpack.c.bf16 %v1898, %v1894
      %v2036 = vpack.c.bf16 %v1906, %v1902
      %v2037 = vpack.c.bf16 %v1908, %v1904
      %v2038 = vpack.c.bf16 %v1916, %v1912
      %v2039 = vpack.c.bf16 %v1918, %v1914
      %v2040 = vpack.c.bf16 %v1926, %v1922
      %v2041 = vpack.c.bf16 %v1928, %v1924
      %v2042 = vpack.c.bf16 %v1936, %v1932
      %v2043 = vpack.c.bf16 %v1938, %v1934
      %v2044 = vpack.c.bf16 %v1946, %v1942
      %v2045 = vpack.c.bf16 %v1948, %v1944
      %v2046 = vpack.c.bf16 %v1956, %v1952
      %v2047 = vpack.c.bf16 %v1958, %v1954
      %v2048 = vpack.c.bf16 %v1966, %v1962
      %v2049 = vpack.c.bf16 %v1968, %v1964
      %v2050 = vpack.c.bf16 %v1976, %v1972
      %v2051 = vpack.c.bf16 %v1978, %v1974
      %v2052 = vpack.c.bf16 %v1986, %v1982
      %v2053 = vpack.c.bf16 %v1988, %v1984
      %v2054 = vpack.c.bf16 %v1996, %v1992
      %v2055 = vpack.c.bf16 %v1998, %v1994
      %v2056 = vpack.c.bf16 %v2006, %v2002
      %v2057 = vpack.c.bf16 %v2008, %v2004
      %v2058 = vpack.c.bf16 %v2016, %v2012
      %v2059 = vpack.c.bf16 %v2018, %v2014
      %v2060 = vpack.c.bf16 %v2026, %v2022
      %v2061 = vpack.c.bf16 %v2028, %v2024
      %v2062 = vld [vmem:[%s6] sm:$0xff]
      %v2063 = vld [vmem:[%s6 + $0x8] sm:$0xff]
      %v2064 = vld [vmem:[%s6 + $0x10] sm:$0xff]
      %v2065 = vld [vmem:[%s6 + $0x18] sm:$0xff]
      %v2066 = vld [vmem:[%s6 + $0x20] sm:$0xff]
      %v2067 = vld [vmem:[%s6 + $0x28] sm:$0xff]
      %v2068 = vld [vmem:[%s6 + $0x30] sm:$0xff]
      %v2069 = vld [vmem:[%s6 + $0x38] sm:$0xff]
      %v2070 = vld [vmem:[%s6 + $0x40] sm:$0xff]
      %v2071 = vld [vmem:[%s6 + $0x48] sm:$0xff]
      %v2072 = vld [vmem:[%s6 + $0x50] sm:$0xff]
      %v2073 = vld [vmem:[%s6 + $0x58] sm:$0xff]
      %v2074 = vld [vmem:[%s6 + $0x60] sm:$0xff]
      %v2075 = vld [vmem:[%s6 + $0x68] sm:$0xff]
      %v2076 = vld [vmem:[%s6 + $0x70] sm:$0xff]
      %v2077 = vld [vmem:[%s6 + $0x78] sm:$0xff]
      %v2078 = vld [vmem:[%s6 + $0x80] sm:$0xff]
      %v2079 = vld [vmem:[%s6 + $0x88] sm:$0xff]
      %v2080 = vld [vmem:[%s6 + $0x90] sm:$0xff]
      %v2081 = vld [vmem:[%s6 + $0x98] sm:$0xff]
      %v2082 = vld [vmem:[%s6 + $0xa0] sm:$0xff]
      %v2083 = vld [vmem:[%s6 + $0xa8] sm:$0xff]
      %v2084 = vld [vmem:[%s6 + $0xb0] sm:$0xff]
      %v2085 = vld [vmem:[%s6 + $0xb8] sm:$0xff]
      %v2086 = vld [vmem:[%s6 + $0xc0] sm:$0xff]
      %v2087 = vld [vmem:[%s6 + $0xc8] sm:$0xff]
      %v2088 = vld [vmem:[%s6 + $0xd0] sm:$0xff]
      %v2089 = vld [vmem:[%s6 + $0xd8] sm:$0xff]
      %v2090 = vld [vmem:[%s6 + $0xe0] sm:$0xff]
      %v2091 = vld [vmem:[%s6 + $0xe8] sm:$0xff]
      %v2092 = vld [vmem:[%s6 + $0xf0] sm:$0xff]
      %v2093 = vld [vmem:[%s6 + $0xf8] sm:$0xff]
      %v2094 = vld [vmem:[%s6 + $0x100] sm:$0xff]
      %v2095 = vld [vmem:[%s6 + $0x108] sm:$0xff]
      %v2096 = vld [vmem:[%s6 + $0x110] sm:$0xff]
      %v2097 = vld [vmem:[%s7] sm:$0xff]
      %v2098 = vld [vmem:[%s7 + $0x8] sm:$0xff]
      %v2099 = vld [vmem:[%s7 + $0x10] sm:$0xff]
      %v2100 = vld [vmem:[%s7 + $0x18] sm:$0xff]
      %v2101 = vld [vmem:[%s7 + $0x20] sm:$0xff]
      %v2102 = vld [vmem:[%s7 + $0x28] sm:$0xff]
      %v2103 = vld [vmem:[%s7 + $0x30] sm:$0xff]
      %v2104 = vld [vmem:[%s7 + $0x38] sm:$0xff]
      %v2105 = vld [vmem:[%s7 + $0x40] sm:$0xff]
      %v2106 = vld [vmem:[%s7 + $0x48] sm:$0xff]
      %v2107 = vld [vmem:[%s7 + $0x50] sm:$0xff]
      %v2108 = vld [vmem:[%s7 + $0x58] sm:$0xff]
      %v2109 = vld [vmem:[%s7 + $0x60] sm:$0xff]
      %v2110 = vld [vmem:[%s7 + $0x68] sm:$0xff]
      %v2111 = vld [vmem:[%s7 + $0x70] sm:$0xff]
      %v2112 = vld [vmem:[%s7 + $0x78] sm:$0xff]
      %v2113 = vld [vmem:[%s7 + $0x80] sm:$0xff]
      %v2114 = vld [vmem:[%s7 + $0x88] sm:$0xff]
      %v2115 = vld [vmem:[%s7 + $0x90] sm:$0xff]
      %v2116 = vld [vmem:[%s7 + $0x98] sm:$0xff]
      %v2117 = vld [vmem:[%s7 + $0xa0] sm:$0xff]
      %v2118 = vld [vmem:[%s7 + $0xa8] sm:$0xff]
      %v2119 = vld [vmem:[%s7 + $0xb0] sm:$0xff]
      %v2120 = vld [vmem:[%s7 + $0xb8] sm:$0xff]
      %v2121 = vld [vmem:[%s7 + $0xc0] sm:$0xff]
      %v2122 = vld [vmem:[%s7 + $0xc8] sm:$0xff]
      %v2123 = vld [vmem:[%s7 + $0xd0] sm:$0xff]
      %v2124 = vld [vmem:[%s7 + $0xd8] sm:$0xff]
      %v2125 = vld [vmem:[%s7 + $0xe0] sm:$0xff]
      %v2126 = vld [vmem:[%s7 + $0xe8] sm:$0xff]
      %v2127 = vld [vmem:[%s7 + $0xf0] sm:$0xff]
      %v2128 = vld [vmem:[%s7 + $0xf8] sm:$0xff]
      %v2129 = vld [vmem:[%s7 + $0x100] sm:$0xff]
      %v2130 = vld [vmem:[%s7 + $0x108] sm:$0xff]
      %v2131 = vld [vmem:[%s7 + $0x110] sm:$0xff]
      %2133 = vset.pattern.permute.xlu0 0
      %2134 = vperm.xlu0 %2133, %v2097
      %v2135 = vpop.permute.xlu0 %2134
      %2138 = vset.pattern.permute.xlu0 0
      %2139 = vperm.xlu0 %2138, %v2098
      %v2140 = vpop.permute.xlu0 %2139
      %2143 = vset.pattern.permute.xlu0 0
      %2144 = vperm.xlu0 %2143, %v2099
      %v2145 = vpop.permute.xlu0 %2144
      %2148 = vset.pattern.permute.xlu0 0
      %2149 = vperm.xlu0 %2148, %v2100
      %v2150 = vpop.permute.xlu0 %2149
      %2153 = vset.pattern.permute.xlu0 0
      %2154 = vperm.xlu0 %2153, %v2101
      %v2155 = vpop.permute.xlu0 %2154
      %2158 = vset.pattern.permute.xlu0 0
      %2159 = vperm.xlu0 %2158, %v2102
      %v2160 = vpop.permute.xlu0 %2159
      %2163 = vset.pattern.permute.xlu0 0
      %2164 = vperm.xlu0 %2163, %v2103
      %v2165 = vpop.permute.xlu0 %2164
      %2168 = vset.pattern.permute.xlu0 0
      %2169 = vperm.xlu0 %2168, %v2104
      %v2170 = vpop.permute.xlu0 %2169
      %2173 = vset.pattern.permute.xlu0 0
      %2174 = vperm.xlu0 %2173, %v2105
      %v2175 = vpop.permute.xlu0 %2174
      %2178 = vset.pattern.permute.xlu0 0
      %2179 = vperm.xlu0 %2178, %v2106
      %v2180 = vpop.permute.xlu0 %2179
      %2183 = vset.pattern.permute.xlu0 0
      %2184 = vperm.xlu0 %2183, %v2107
      %v2185 = vpop.permute.xlu0 %2184
      %2188 = vset.pattern.permute.xlu0 0
      %2189 = vperm.xlu0 %2188, %v2108
      %v2190 = vpop.permute.xlu0 %2189
      %2193 = vset.pattern.permute.xlu0 0
      %2194 = vperm.xlu0 %2193, %v2109
      %v2195 = vpop.permute.xlu0 %2194
      %2198 = vset.pattern.permute.xlu0 0
      %2199 = vperm.xlu0 %2198, %v2110
      %v2200 = vpop.permute.xlu0 %2199
      %2203 = vset.pattern.permute.xlu0 0
      %2204 = vperm.xlu0 %2203, %v2111
      %v2205 = vpop.permute.xlu0 %2204
      %2208 = vset.pattern.permute.xlu0 0
      %2209 = vperm.xlu0 %2208, %v2112
      %v2210 = vpop.permute.xlu0 %2209
      %2213 = vset.pattern.permute.xlu0 0
      %2214 = vperm.xlu0 %2213, %v2113
      %v2215 = vpop.permute.xlu0 %2214
      %2218 = vset.pattern.permute.xlu0 0
      %2219 = vperm.xlu0 %2218, %v2114
      %v2220 = vpop.permute.xlu0 %2219
      %2223 = vset.pattern.permute.xlu0 0
      %2224 = vperm.xlu0 %2223, %v2115
      %v2225 = vpop.permute.xlu0 %2224
      %2228 = vset.pattern.permute.xlu0 0
      %2229 = vperm.xlu0 %2228, %v2116
      %v2230 = vpop.permute.xlu0 %2229
      %2233 = vset.pattern.permute.xlu0 0
      %2234 = vperm.xlu0 %2233, %v2117
      %v2235 = vpop.permute.xlu0 %2234
      %2238 = vset.pattern.permute.xlu0 0
      %2239 = vperm.xlu0 %2238, %v2118
      %v2240 = vpop.permute.xlu0 %2239
      %2243 = vset.pattern.permute.xlu0 0
      %2244 = vperm.xlu0 %2243, %v2119
      %v2245 = vpop.permute.xlu0 %2244
      %2248 = vset.pattern.permute.xlu0 0
      %2249 = vperm.xlu0 %2248, %v2120
      %v2250 = vpop.permute.xlu0 %2249
      %2253 = vset.pattern.permute.xlu0 0
      %2254 = vperm.xlu0 %2253, %v2121
      %v2255 = vpop.permute.xlu0 %2254
      %2258 = vset.pattern.permute.xlu0 0
      %2259 = vperm.xlu0 %2258, %v2122
      %v2260 = vpop.permute.xlu0 %2259
      %2263 = vset.pattern.permute.xlu0 0
      %2264 = vperm.xlu0 %2263, %v2123
      %v2265 = vpop.permute.xlu0 %2264
      %2268 = vset.pattern.permute.xlu0 0
      %2269 = vperm.xlu0 %2268, %v2124
      %v2270 = vpop.permute.xlu0 %2269
      %2273 = vset.pattern.permute.xlu0 0
      %2274 = vperm.xlu0 %2273, %v2125
      %v2275 = vpop.permute.xlu0 %2274
      %2278 = vset.pattern.permute.xlu0 0
      %2279 = vperm.xlu0 %2278, %v2126
      %v2280 = vpop.permute.xlu0 %2279
      %2283 = vset.pattern.permute.xlu0 0
      %2284 = vperm.xlu0 %2283, %v2127
      %v2285 = vpop.permute.xlu0 %2284
      %2288 = vset.pattern.permute.xlu0 0
      %2289 = vperm.xlu0 %2288, %v2128
      %v2290 = vpop.permute.xlu0 %2289
      %2293 = vset.pattern.permute.xlu0 0
      %2294 = vperm.xlu0 %2293, %v2129
      %v2295 = vpop.permute.xlu0 %2294
      %2298 = vset.pattern.permute.xlu0 0
      %2299 = vperm.xlu0 %2298, %v2130
      %v2300 = vpop.permute.xlu0 %2299
      %2303 = vset.pattern.permute.xlu0 0
      %2304 = vperm.xlu0 %2303, %v2131
      %v2305 = vpop.permute.xlu0 %2304
      %v2342 = vunpack.c.l.b16 %v2062
      %v2343 = vunpack.c.h.b16 %v2062
      %v2344 = vunpack.c.l.b16 %v2063
      %v2345 = vunpack.c.h.b16 %v2063
      %v2346 = vunpack.c.l.b16 %v2064
      %v2347 = vunpack.c.h.b16 %v2064
      %v2348 = vunpack.c.l.b16 %v2065
      %v2349 = vunpack.c.h.b16 %v2065
      %v2350 = vunpack.c.l.b16 %v2066
      %v2351 = vunpack.c.h.b16 %v2066
      %v2352 = vunpack.c.l.b16 %v2067
      %v2353 = vunpack.c.h.b16 %v2067
      %v2354 = vunpack.c.l.b16 %v2068
      %v2355 = vunpack.c.h.b16 %v2068
      %v2356 = vunpack.c.l.b16 %v2069
      %v2357 = vunpack.c.h.b16 %v2069
      %v2358 = vunpack.c.l.b16 %v2070
      %v2359 = vunpack.c.h.b16 %v2070
      %v2360 = vunpack.c.l.b16 %v2071
      %v2361 = vunpack.c.h.b16 %v2071
      %v2362 = vunpack.c.l.b16 %v2072
      %v2363 = vunpack.c.h.b16 %v2072
      %v2364 = vunpack.c.l.b16 %v2073
      %v2365 = vunpack.c.h.b16 %v2073
      %v2366 = vunpack.c.l.b16 %v2074
      %v2367 = vunpack.c.h.b16 %v2074
      %v2368 = vunpack.c.l.b16 %v2075
      %v2369 = vunpack.c.h.b16 %v2075
      %v2370 = vunpack.c.l.b16 %v2076
      %v2371 = vunpack.c.h.b16 %v2076
      %v2372 = vunpack.c.l.b16 %v2077
      %v2373 = vunpack.c.h.b16 %v2077
      %v2374 = vunpack.c.l.b16 %v2078
      %v2375 = vunpack.c.h.b16 %v2078
      %v2376 = vunpack.c.l.b16 %v2079
      %v2377 = vunpack.c.h.b16 %v2079
      %v2378 = vunpack.c.l.b16 %v2080
      %v2379 = vunpack.c.h.b16 %v2080
      %v2380 = vunpack.c.l.b16 %v2081
      %v2381 = vunpack.c.h.b16 %v2081
      %v2382 = vunpack.c.l.b16 %v2082
      %v2383 = vunpack.c.h.b16 %v2082
      %v2384 = vunpack.c.l.b16 %v2083
      %v2385 = vunpack.c.h.b16 %v2083
      %v2386 = vunpack.c.l.b16 %v2084
      %v2387 = vunpack.c.h.b16 %v2084
      %v2388 = vunpack.c.l.b16 %v2085
      %v2389 = vunpack.c.h.b16 %v2085
      %v2390 = vunpack.c.l.b16 %v2086
      %v2391 = vunpack.c.h.b16 %v2086
      %v2392 = vunpack.c.l.b16 %v2087
      %v2393 = vunpack.c.h.b16 %v2087
      %v2394 = vunpack.c.l.b16 %v2088
      %v2395 = vunpack.c.h.b16 %v2088
      %v2396 = vunpack.c.l.b16 %v2089
      %v2397 = vunpack.c.h.b16 %v2089
      %v2398 = vunpack.c.l.b16 %v2090
      %v2399 = vunpack.c.h.b16 %v2090
      %v2400 = vunpack.c.l.b16 %v2091
      %v2401 = vunpack.c.h.b16 %v2091
      %v2402 = vunpack.c.l.b16 %v2092
      %v2403 = vunpack.c.h.b16 %v2092
      %v2404 = vunpack.c.l.b16 %v2093
      %v2405 = vunpack.c.h.b16 %v2093
      %v2406 = vunpack.c.l.b16 %v2094
      %v2407 = vunpack.c.h.b16 %v2094
      %v2408 = vunpack.c.l.b16 %v2095
      %v2409 = vunpack.c.h.b16 %v2095
      %v2410 = vunpack.c.l.b16 %v2096
      %v2411 = vunpack.c.h.b16 %v2096
      %v2412 = vpack.c.b16 %v2344, %v2342
      %v2413 = vpack.c.b16 %v2345, %v2343
      %v2414 = vpack.c.b16 %v2348, %v2346
      %v2415 = vpack.c.b16 %v2349, %v2347
      %v2416 = vpack.c.b16 %v2352, %v2350
      %v2417 = vpack.c.b16 %v2353, %v2351
      %v2418 = vpack.c.b16 %v2356, %v2354
      %v2419 = vpack.c.b16 %v2357, %v2355
      %v2420 = vpack.c.b16 %v2360, %v2358
      %v2421 = vpack.c.b16 %v2361, %v2359
      %v2422 = vpack.c.b16 %v2364, %v2362
      %v2423 = vpack.c.b16 %v2365, %v2363
      %v2424 = vpack.c.b16 %v2368, %v2366
      %v2425 = vpack.c.b16 %v2369, %v2367
      %v2426 = vpack.c.b16 %v2372, %v2370
      %v2427 = vpack.c.b16 %v2373, %v2371
      %v2428 = vpack.c.b16 %v2376, %v2374
      %v2429 = vpack.c.b16 %v2377, %v2375
      %v2430 = vpack.c.b16 %v2380, %v2378
      %v2431 = vpack.c.b16 %v2381, %v2379
      %v2432 = vpack.c.b16 %v2384, %v2382
      %v2433 = vpack.c.b16 %v2385, %v2383
      %v2434 = vpack.c.b16 %v2388, %v2386
      %v2435 = vpack.c.b16 %v2389, %v2387
      %v2436 = vpack.c.b16 %v2392, %v2390
      %v2437 = vpack.c.b16 %v2393, %v2391
      %v2438 = vpack.c.b16 %v2396, %v2394
      %v2439 = vpack.c.b16 %v2397, %v2395
      %v2440 = vpack.c.b16 %v2400, %v2398
      %v2441 = vpack.c.b16 %v2401, %v2399
      %v2442 = vpack.c.b16 %v2404, %v2402
      %v2443 = vpack.c.b16 %v2405, %v2403
      %v2444 = vpack.c.b16 %v2408, %v2406
      %v2445 = vpack.c.b16 %v2409, %v2407
      %v2446 = vpack.c.b16 %v2410, %v2410
      %v2447 = vpack.c.b16 %v2411, %v2411
      %2484 = vmatprep.subr.bf16.mxu0 %v2031
      %2485 = vmatpush1.bf16.msra.mxu0 %v2030
      %2486 = vmatprep.subr.bf16.mxu0 %v2033
      %2487 = vmatpush1.bf16.msra.mxu0 %v2032
      %2488 = vmatprep.subr.bf16.mxu0 %v2035
      %2489 = vmatpush1.bf16.msra.mxu0 %v2034
      %2490 = vmatprep.subr.bf16.mxu0 %v2037
      %2491 = vmatpush1.bf16.msra.mxu0 %v2036
      %2492 = vmatprep.subr.bf16.mxu0 %v2039
      %2493 = vmatpush1.bf16.msra.mxu0 %v2038
      %2494 = vmatprep.subr.bf16.mxu0 %v2041
      %2495 = vmatpush1.bf16.msra.mxu0 %v2040
      %2496 = vmatprep.subr.bf16.mxu0 %v2043
      %2497 = vmatpush1.bf16.msra.mxu0 %v2042
      %2498 = vmatprep.subr.bf16.mxu0 %v2045
      %2499 = vmatpush1.bf16.msra.mxu0 %v2044
      %2500 = vmatprep.subr.bf16.mxu0 %v2047
      %2501 = vmatpush1.bf16.msra.mxu0 %v2046
      %2502 = vmatprep.subr.bf16.mxu0 %v2049
      %2503 = vmatpush1.bf16.msra.mxu0 %v2048
      %2504 = vmatprep.subr.bf16.mxu0 %v2051
      %2505 = vmatpush1.bf16.msra.mxu0 %v2050
      %2506 = vmatprep.subr.bf16.mxu0 %v2053
      %2507 = vmatpush1.bf16.msra.mxu0 %v2052
      %2508 = vmatprep.subr.bf16.mxu0 %v2055
      %2509 = vmatpush1.bf16.msra.mxu0 %v2054
      %2510 = vmatprep.subr.bf16.mxu0 %v2057
      %2511 = vmatpush1.bf16.msra.mxu0 %v2056
      %2512 = vmatprep.subr.bf16.mxu0 %v2059
      %2513 = vmatpush1.bf16.msra.mxu0 %v2058
      %2514 = vmatprep.subr.bf16.mxu0 %v2061
      %2515 = vmatpush1.bf16.msra.mxu0 %v2060
      %2516 = vmatprep.mubr.bf16.mxu0 %v2413
      %2517 = vmatmul.mubr.bf16.gmra.mrb[0].mxu0 %v2412
      %v2518 = vpop.f32.mrb[0].mxu0
      %v2519 = vadd.f32 %v2135, %v2518
      %v2520 = vpop.f32.mrb[0].mxu0
      %v2521 = vadd.f32 %v2135, %v2520
      %v2522 = vpop.f32.mrb[0].mxu0
      %v2523 = vadd.f32 %v2140, %v2522
      %v2524 = vpop.f32.mrb[0].mxu0
      %v2525 = vadd.f32 %v2140, %v2524
      %2526 = vmatprep.mubr.bf16.mxu0 %v2415
      %2527 = vmatmul.mubr.bf16.gmra.mrb[0].mxu0 %v2414
      %v2528 = vpop.f32.mrb[0].mxu0
      %v2529 = vadd.f32 %v2145, %v2528
      %v2530 = vpop.f32.mrb[0].mxu0
      %v2531 = vadd.f32 %v2145, %v2530
      %v2532 = vpop.f32.mrb[0].mxu0
      %v2533 = vadd.f32 %v2150, %v2532
      %v2534 = vpop.f32.mrb[0].mxu0
      %v2535 = vadd.f32 %v2150, %v2534
      %2536 = vmatprep.mubr.bf16.mxu0 %v2417
      %2537 = vmatmul.mubr.bf16.gmra.mrb[0].mxu0 %v2416
      %v2538 = vpop.f32.mrb[0].mxu0
      %v2539 = vadd.f32 %v2155, %v2538
      %v2540 = vpop.f32.mrb[0].mxu0
      %v2541 = vadd.f32 %v2155, %v2540
      %v2542 = vpop.f32.mrb[0].mxu0
      %v2543 = vadd.f32 %v2160, %v2542
      %v2544 = vpop.f32.mrb[0].mxu0
      %v2545 = vadd.f32 %v2160, %v2544
      %2546 = vmatprep.mubr.bf16.mxu0 %v2419
      %2547 = vmatmul.mubr.bf16.gmra.mrb[0].mxu0 %v2418
      %v2548 = vpop.f32.mrb[0].mxu0
      %v2549 = vadd.f32 %v2165, %v2548
      %v2550 = vpop.f32.mrb[0].mxu0
      %v2551 = vadd.f32 %v2165, %v2550
      %v2552 = vpop.f32.mrb[0].mxu0
      %v2553 = vadd.f32 %v2170, %v2552
      %v2554 = vpop.f32.mrb[0].mxu0
      %v2555 = vadd.f32 %v2170, %v2554
      %2556 = vmatprep.mubr.bf16.mxu0 %v2421
      %2557 = vmatmul.mubr.bf16.gmra.mrb[0].mxu0 %v2420
      %v2558 = vpop.f32.mrb[0].mxu0
      %v2559 = vadd.f32 %v2175, %v2558
      %v2560 = vpop.f32.mrb[0].mxu0
      %v2561 = vadd.f32 %v2175, %v2560
      %v2562 = vpop.f32.mrb[0].mxu0
      %v2563 = vadd.f32 %v2180, %v2562
      %v2564 = vpop.f32.mrb[0].mxu0
      %v2565 = vadd.f32 %v2180, %v2564
      %2566 = vmatprep.mubr.bf16.mxu0 %v2423
      %2567 = vmatmul.mubr.bf16.gmra.mrb[0].mxu0 %v2422
      %v2568 = vpop.f32.mrb[0].mxu0
      %v2569 = vadd.f32 %v2185, %v2568
      %v2570 = vpop.f32.mrb[0].mxu0
      %v2571 = vadd.f32 %v2185, %v2570
      %v2572 = vpop.f32.mrb[0].mxu0
      %v2573 = vadd.f32 %v2190, %v2572
      %v2574 = vpop.f32.mrb[0].mxu0
      %v2575 = vadd.f32 %v2190, %v2574
      %2576 = vmatprep.mubr.bf16.mxu0 %v2425
      %2577 = vmatmul.mubr.bf16.gmra.mrb[0].mxu0 %v2424
      %v2578 = vpop.f32.mrb[0].mxu0
      %v2579 = vadd.f32 %v2195, %v2578
      %v2580 = vpop.f32.mrb[0].mxu0
      %v2581 = vadd.f32 %v2195, %v2580
      %v2582 = vpop.f32.mrb[0].mxu0
      %v2583 = vadd.f32 %v2200, %v2582
      %v2584 = vpop.f32.mrb[0].mxu0
      %v2585 = vadd.f32 %v2200, %v2584
      %2586 = vmatprep.mubr.bf16.mxu0 %v2427
      %2587 = vmatmul.mubr.bf16.gmra.mrb[0].mxu0 %v2426
      %v2588 = vpop.f32.mrb[0].mxu0
      %v2589 = vadd.f32 %v2205, %v2588
      %v2590 = vpop.f32.mrb[0].mxu0
      %v2591 = vadd.f32 %v2205, %v2590
      %v2592 = vpop.f32.mrb[0].mxu0
      %v2593 = vadd.f32 %v2210, %v2592
      %v2594 = vpop.f32.mrb[0].mxu0
      %v2595 = vadd.f32 %v2210, %v2594
      %2596 = vmatprep.mubr.bf16.mxu0 %v2429
      %2597 = vmatmul.mubr.bf16.gmra.mrb[0].mxu0 %v2428
      %v2598 = vpop.f32.mrb[0].mxu0
      %v2599 = vadd.f32 %v2215, %v2598
      %v2600 = vpop.f32.mrb[0].mxu0
      %v2601 = vadd.f32 %v2215, %v2600
      %v2602 = vpop.f32.mrb[0].mxu0
      %v2603 = vadd.f32 %v2220, %v2602
      %v2604 = vpop.f32.mrb[0].mxu0
      %v2605 = vadd.f32 %v2220, %v2604
      %2606 = vmatprep.mubr.bf16.mxu0 %v2431
      %2607 = vmatmul.mubr.bf16.gmra.mrb[0].mxu0 %v2430
      %v2608 = vpop.f32.mrb[0].mxu0
      %v2609 = vadd.f32 %v2225, %v2608
      %v2610 = vpop.f32.mrb[0].mxu0
      %v2611 = vadd.f32 %v2225, %v2610
      %v2612 = vpop.f32.mrb[0].mxu0
      %v2613 = vadd.f32 %v2230, %v2612
      %v2614 = vpop.f32.mrb[0].mxu0
      %v2615 = vadd.f32 %v2230, %v2614
      %2616 = vmatprep.mubr.bf16.mxu0 %v2433
      %2617 = vmatmul.mubr.bf16.gmra.mrb[0].mxu0 %v2432
      %v2618 = vpop.f32.mrb[0].mxu0
      %v2619 = vadd.f32 %v2235, %v2618
      %v2620 = vpop.f32.mrb[0].mxu0
      %v2621 = vadd.f32 %v2235, %v2620
      %v2622 = vpop.f32.mrb[0].mxu0
      %v2623 = vadd.f32 %v2240, %v2622
      %v2624 = vpop.f32.mrb[0].mxu0
      %v2625 = vadd.f32 %v2240, %v2624
      %2626 = vmatprep.mubr.bf16.mxu0 %v2435
      %2627 = vmatmul.mubr.bf16.gmra.mrb[0].mxu0 %v2434
      %v2628 = vpop.f32.mrb[0].mxu0
      %v2629 = vadd.f32 %v2245, %v2628
      %v2630 = vpop.f32.mrb[0].mxu0
      %v2631 = vadd.f32 %v2245, %v2630
      %v2632 = vpop.f32.mrb[0].mxu0
      %v2633 = vadd.f32 %v2250, %v2632
      %v2634 = vpop.f32.mrb[0].mxu0
      %v2635 = vadd.f32 %v2250, %v2634
      %2636 = vmatprep.mubr.bf16.mxu0 %v2437
      %2637 = vmatmul.mubr.bf16.gmra.mrb[0].mxu0 %v2436
      %v2638 = vpop.f32.mrb[0].mxu0
      %v2639 = vadd.f32 %v2255, %v2638
      %v2640 = vpop.f32.mrb[0].mxu0
      %v2641 = vadd.f32 %v2255, %v2640
      %v2642 = vpop.f32.mrb[0].mxu0
      %v2643 = vadd.f32 %v2260, %v2642
      %v2644 = vpop.f32.mrb[0].mxu0
      %v2645 = vadd.f32 %v2260, %v2644
      %2646 = vmatprep.mubr.bf16.mxu0 %v2439
      %2647 = vmatmul.mubr.bf16.gmra.mrb[0].mxu0 %v2438
      %v2648 = vpop.f32.mrb[0].mxu0
      %v2649 = vadd.f32 %v2265, %v2648
      %v2650 = vpop.f32.mrb[0].mxu0
      %v2651 = vadd.f32 %v2265, %v2650
      %v2652 = vpop.f32.mrb[0].mxu0
      %v2653 = vadd.f32 %v2270, %v2652
      %v2654 = vpop.f32.mrb[0].mxu0
      %v2655 = vadd.f32 %v2270, %v2654
      %2656 = vmatprep.mubr.bf16.mxu0 %v2441
      %2657 = vmatmul.mubr.bf16.gmra.mrb[0].mxu0 %v2440
      %v2658 = vpop.f32.mrb[0].mxu0
      %v2659 = vadd.f32 %v2275, %v2658
      %v2660 = vpop.f32.mrb[0].mxu0
      %v2661 = vadd.f32 %v2275, %v2660
      %v2662 = vpop.f32.mrb[0].mxu0
      %v2663 = vadd.f32 %v2280, %v2662
      %v2664 = vpop.f32.mrb[0].mxu0
      %v2665 = vadd.f32 %v2280, %v2664
      %2666 = vmatprep.mubr.bf16.mxu0 %v2443
      %2667 = vmatmul.mubr.bf16.gmra.mrb[0].mxu0 %v2442
      %v2668 = vpop.f32.mrb[0].mxu0
      %v2669 = vadd.f32 %v2285, %v2668
      %v2670 = vpop.f32.mrb[0].mxu0
      %v2671 = vadd.f32 %v2285, %v2670
      %v2672 = vpop.f32.mrb[0].mxu0
      %v2673 = vadd.f32 %v2290, %v2672
      %v2674 = vpop.f32.mrb[0].mxu0
      %v2675 = vadd.f32 %v2290, %v2674
      %2676 = vmatprep.mubr.bf16.mxu0 %v2445
      %2677 = vmatmul.mubr.bf16.gmra.mrb[0].mxu0 %v2444
      %v2678 = vpop.f32.mrb[0].mxu0
      %v2679 = vadd.f32 %v2295, %v2678
      %v2680 = vpop.f32.mrb[0].mxu0
      %v2681 = vadd.f32 %v2295, %v2680
      %v2682 = vpop.f32.mrb[0].mxu0
      %v2683 = vadd.f32 %v2300, %v2682
      %v2684 = vpop.f32.mrb[0].mxu0
      %v2685 = vadd.f32 %v2300, %v2684
      %2686 = vmatprep.mubr.bf16.mxu0 %v2447
      %2687 = vmatmul.mubr.bf16.gmra.mrb[0].mxu0 %v2446
      %v2688 = vpop.f32.mrb[0].mxu0
      %v2689 = vadd.f32 %v2305, %v2688
      %v2690 = vpop.f32.mrb[0].mxu0
      %v2691 = vadd.f32 %v2305, %v2690
      %v2692 = vpop.f32.mrb[0].mxu0
      %v2693 = vpop.f32.mrb[0].mxu0
      %2694 = vdwg.mxu0
      %2695 = vst [vmem:[%s365] sm:$0xff] %v2519
      %2696 = vst [vmem:[%s365 + $0x8] sm:$0xff] %v2521
      %2697 = vst [vmem:[%s365 + $0x10] sm:$0xff] %v2523
      %2698 = vst [vmem:[%s365 + $0x18] sm:$0xff] %v2525
      %2699 = vst [vmem:[%s365 + $0x20] sm:$0xff] %v2529
      %2700 = vst [vmem:[%s365 + $0x28] sm:$0xff] %v2531
      %2701 = vst [vmem:[%s365 + $0x30] sm:$0xff] %v2533
      %2702 = vst [vmem:[%s365 + $0x38] sm:$0xff] %v2535
      %2703 = vst [vmem:[%s365 + $0x40] sm:$0xff] %v2539
      %2704 = vst [vmem:[%s365 + $0x48] sm:$0xff] %v2541
      %2705 = vst [vmem:[%s365 + $0x50] sm:$0xff] %v2543
      %2706 = vst [vmem:[%s365 + $0x58] sm:$0xff] %v2545
      %2707 = vst [vmem:[%s365 + $0x60] sm:$0xff] %v2549
      %2708 = vst [vmem:[%s365 + $0x68] sm:$0xff] %v2551
      %2709 = vst [vmem:[%s365 + $0x70] sm:$0xff] %v2553
      %2710 = vst [vmem:[%s365 + $0x78] sm:$0xff] %v2555
      %2711 = vst [vmem:[%s365 + $0x80] sm:$0xff] %v2559
      %2712 = vst [vmem:[%s365 + $0x88] sm:$0xff] %v2561
      %2713 = vst [vmem:[%s365 + $0x90] sm:$0xff] %v2563
      %2714 = vst [vmem:[%s365 + $0x98] sm:$0xff] %v2565
      %2715 = vst [vmem:[%s365 + $0xa0] sm:$0xff] %v2569
      %2716 = vst [vmem:[%s365 + $0xa8] sm:$0xff] %v2571
      %2717 = vst [vmem:[%s365 + $0xb0] sm:$0xff] %v2573
      %2718 = vst [vmem:[%s365 + $0xb8] sm:$0xff] %v2575
      %2719 = vst [vmem:[%s365 + $0xc0] sm:$0xff] %v2579
      %2720 = vst [vmem:[%s365 + $0xc8] sm:$0xff] %v2581
      %2721 = vst [vmem:[%s365 + $0xd0] sm:$0xff] %v2583
      %2722 = vst [vmem:[%s365 + $0xd8] sm:$0xff] %v2585
      %2723 = vst [vmem:[%s365 + $0xe0] sm:$0xff] %v2589
      %2724 = vst [vmem:[%s365 + $0xe8] sm:$0xff] %v2591
      %2725 = vst [vmem:[%s365 + $0xf0] sm:$0xff] %v2593
      %2726 = vst [vmem:[%s365 + $0xf8] sm:$0xff] %v2595
      %2727 = vst [vmem:[%s365 + $0x100] sm:$0xff] %v2599
      %2728 = vst [vmem:[%s365 + $0x108] sm:$0xff] %v2601
      %2729 = vst [vmem:[%s365 + $0x110] sm:$0xff] %v2603
      %2730 = vst [vmem:[%s365 + $0x118] sm:$0xff] %v2605
      %2731 = vst [vmem:[%s365 + $0x120] sm:$0xff] %v2609
      %2732 = vst [vmem:[%s365 + $0x128] sm:$0xff] %v2611
      %2733 = vst [vmem:[%s365 + $0x130] sm:$0xff] %v2613
      %2734 = vst [vmem:[%s365 + $0x138] sm:$0xff] %v2615
      %2735 = vst [vmem:[%s365 + $0x140] sm:$0xff] %v2619
      %2736 = vst [vmem:[%s365 + $0x148] sm:$0xff] %v2621
      %2737 = vst [vmem:[%s365 + $0x150] sm:$0xff] %v2623
      %2738 = vst [vmem:[%s365 + $0x158] sm:$0xff] %v2625
      %2739 = vst [vmem:[%s365 + $0x160] sm:$0xff] %v2629
      %2740 = vst [vmem:[%s365 + $0x168] sm:$0xff] %v2631
      %2741 = vst [vmem:[%s365 + $0x170] sm:$0xff] %v2633
      %2742 = vst [vmem:[%s365 + $0x178] sm:$0xff] %v2635
      %2743 = vst [vmem:[%s365 + $0x180] sm:$0xff] %v2639
      %2744 = vst [vmem:[%s365 + $0x188] sm:$0xff] %v2641
      %2745 = vst [vmem:[%s365 + $0x190] sm:$0xff] %v2643
      %2746 = vst [vmem:[%s365 + $0x198] sm:$0xff] %v2645
      %2747 = vst [vmem:[%s365 + $0x1a0] sm:$0xff] %v2649
      %2748 = vst [vmem:[%s365 + $0x1a8] sm:$0xff] %v2651
      %2749 = vst [vmem:[%s365 + $0x1b0] sm:$0xff] %v2653
      %2750 = vst [vmem:[%s365 + $0x1b8] sm:$0xff] %v2655
      %2751 = vst [vmem:[%s365 + $0x1c0] sm:$0xff] %v2659
      %2752 = vst [vmem:[%s365 + $0x1c8] sm:$0xff] %v2661
      %2753 = vst [vmem:[%s365 + $0x1d0] sm:$0xff] %v2663
      %2754 = vst [vmem:[%s365 + $0x1d8] sm:$0xff] %v2665
      %2755 = vst [vmem:[%s365 + $0x1e0] sm:$0xff] %v2669
      %2756 = vst [vmem:[%s365 + $0x1e8] sm:$0xff] %v2671
      %2757 = vst [vmem:[%s365 + $0x1f0] sm:$0xff] %v2673
      %2758 = vst [vmem:[%s365 + $0x1f8] sm:$0xff] %v2675
      %2759 = vst [vmem:[%s360] sm:$0xff] %v2679
      %2760 = vst [vmem:[%s360 + $0x8] sm:$0xff] %v2681
      %2761 = vst [vmem:[%s360 + $0x10] sm:$0xff] %v2683
      %2762 = vst [vmem:[%s360 + $0x18] sm:$0xff] %v2685
      %2763 = vst [vmem:[%s360 + $0x20] sm:$0xff] %v2689
      %2764 = vst [vmem:[%s360 + $0x28] sm:$0xff] %v2691
      %p2765 = scmp.lt.s32.totalorder %s21, 1
      %s2766 = scalar_select %p2765, %s21, 1
      %s2767 = smul.addr %s2766, 6
      %s2768 = smul.addr %s2767, 8
      %s2769 = scalar_lea.vmem %s8, %s2768
      %p2770 = scmp.lt.s32.totalorder %s21, 1
      %s2771 = scalar_select %p2770, %s21, 1
      %s2772 = smul.addr %s2771, 64
      %s2773 = smul.addr %s2772, 8
      %s2774 = scalar_lea.vmem %s9, %s2773
      // Predicated region
      $region53: #{decoder_module_forward.1} parent=51 // pred_check
        %p2775 = pneg %p217
      $region54: #{decoder_module_forward.1} parent=51 // pred_check_branch
        %2777 = sbr.rel (%p2775) target = $region56
      $region55: #{decoder_module_forward.1} parent=51 // pred_region
        _
      $region56: #{decoder_module_forward.1} parent=51 // pred_fallthru
        _
      // Predicated region
      $region57: #{decoder_module_forward.1} parent=51 // pred_check
        %p2778 = pneg %p243
      $region58: #{decoder_module_forward.1} parent=51 // pred_check_branch
        %2780 = sbr.rel (%p2778) target = $region60
      $region59: #{decoder_module_forward.1} parent=51 // pred_region
        _
      $region60: #{decoder_module_forward.1} parent=51 // pred_fallthru
        _
    $region52: #{decoder_module_forward.1} parent=5 // pred_fallthru
      _
    %p2781 = scmp.le.s32.totalorder 2, %s16
    // Predicated region
    $region61: #{decoder_module_forward.1} parent=5 // pred_check
      %p2782 = pneg %p2781
    $region62: #{decoder_module_forward.1} parent=5 // pred_check_branch
      %2784 = sbr.rel (%p2782) target = $region64
    $region63: #{decoder_module_forward.1} parent=5 // pred_region
      %s2785 = ssub.s32 %s16, 2
      // Predicated region
      $region65: #{decoder_module_forward.1} parent=63 // pred_check
        %p2786 = pneg %p223
      $region66: #{decoder_module_forward.1} parent=63 // pred_check_branch
        %2788 = sbr.rel (%p2786) target = $region68
      $region67: #{decoder_module_forward.1} parent=63 // pred_region
        %p2789 = scmp.lt.s32.totalorder %s22, 1
        %s2790 = scalar_select %p2789, %s22, 1
        %s2791 = smul.addr %s2790, 6
        %s2792 = smul.addr %s2791, 8
        %s2793 = scalar_lea.vmem %s8, %s2792
      $region68: #{decoder_module_forward.1} parent=63 // pred_fallthru
        _
      // Predicated region
      $region69: #{decoder_module_forward.1} parent=63 // pred_check
        %p2794 = pneg %p249
      $region70: #{decoder_module_forward.1} parent=63 // pred_check_branch
        %2796 = sbr.rel (%p2794) target = $region72
      $region71: #{decoder_module_forward.1} parent=63 // pred_region
        %p2797 = scmp.lt.s32.totalorder %s22, 1
        %s2798 = scalar_select %p2797, %s22, 1
        %s2799 = smul.addr %s2798, 64
        %s2800 = smul.addr %s2799, 8
        %s2801 = scalar_lea.vmem %s9, %s2800
      $region72: #{decoder_module_forward.1} parent=63 // pred_fallthru
        _
    $region64: #{decoder_module_forward.1} parent=5 // pred_fallthru
      _
  $region6: #{decoder_module_forward.1} parent=0 // loop_footer
    %s20 = sadd.s32 1, %s16
  $region7: #{decoder_module_forward.1} parent=0 // loop_footer_branch
    %15 = sbr.rel target = $region3
  $region8: #{decoder_module_forward.1} parent=0 // loop_exit
    _

</llo_original>
